<compile_context>
chip_gen: v7x
topology: tpu7x:2x2x1
jax: 0.10.0
libtpu: 0.0.40
codegen_flags: <defaults>
</compile_context>

<pallas_src>
import jax
import jax.numpy as jnp
from jax.experimental import pallas as pl
from jax.experimental.pallas import tpu as pltpu

F32 = jnp.float32


# ----------------------------- fused Pallas kernel ------------------------------

def build_simgnn_forward(dims, slab_offs):
    nid = dims["num_nodes_id"]
    f1, f2, f3 = dims["filters_1"], dims["filters_2"], dims["filters_3"]
    k, bn = dims["tensor_neurons"], dims["bottle_neck_neurons"]
    npad = dims["n_pad"]
    (o_watt, o_wb1t, o_wb2t, o_fc1w, o_wp,
     o_b3, o_ntnb, o_fc1b, o_fc2w, o_fc2b) = slab_offs

    def _sigmoid(x):
        # exp on the EUP + approximate reciprocal (also EUP) -> off the VALU critical path.
        return pl.reciprocal(1.0 + jnp.exp(-x), approx=True)

    def kernel(n_ref, adj_ref, x_ref, w1b_ref, w2b_ref, w3_ref, r12_ref, slab_ref, out_ref):
        a = adj_ref[...]                                       # (2*npad, 2*npad) block-diagonal Ahat

        # ---- GCN x3 on the block-diagonal pair (both graphs in one matmul chain) ----
        h = jnp.dot(x_ref[...], w1b_ref[0:nid, :], preferred_element_type=F32)
        h = jnp.dot(a, h, preferred_element_type=F32) + w1b_ref[nid:nid + 1, :]
        h = jnp.maximum(h, 0.0)
        # TODO(synk): F.dropout is identity here (module evaluated with training=False).
        h = jnp.dot(h, w2b_ref[0:f1, :], preferred_element_type=F32)
        h = jnp.dot(a, h, preferred_element_type=F32) + w2b_ref[f1:f1 + 1, :]
        h = jnp.maximum(h, 0.0)
        h = jnp.dot(h, w3_ref[...], preferred_element_type=F32)
        h = jnp.dot(a, h, preferred_element_type=F32) + slab_ref[o_b3:o_b3 + 1, 0:f3]
        # h: (2*npad, f3); graph 1 -> rows [0, npad), graph 2 -> rows [npad, 2*npad).

        # ---- attention pooling (padded rows masked out) ----
        w_att = slab_ref[o_watt:o_watt + f3, 0:f3]
        row_ids = jax.lax.broadcasted_iota(jnp.int32, (npad, 1), 0)

        def attention(emb, n_true):
            mask = (row_ids < n_true).astype(F32)              # (npad, 1)
            embm = emb * mask                                  # zero out padded rows
            ctx = jnp.sum(jnp.dot(embm, w_att, preferred_element_type=F32),
                          axis=0, keepdims=True) / n_true.astype(F32)      # true mean, (1, f3)
            tg = jnp.tanh(ctx)
            att = _sigmoid(jnp.sum(emb * tg, axis=1, keepdims=True))       # (npad, 1)
            return jnp.sum(embm * att, axis=0, keepdims=True)              # (1, f3) pooled (row form)

        e1 = attention(h[0:npad, :], n_ref[0])
        e2 = attention(h[npad:2 * npad, :], n_ref[1])

        # ---- NTN bilinear term, reshape-free:  score[k] = e1 @ W[:,:,k] @ e2^T ----
        r1 = r12_ref[0:f3, :]                                  # (f3, f3*f3) repeat-e1 indicator
        r2 = r12_ref[f3:2 * f3, :]                             # (f3, f3*f3) tile-e2 indicator
        outer = (jnp.dot(e1, r1, preferred_element_type=F32) *
                 jnp.dot(e2, r2, preferred_element_type=F32))  # (1, f3*f3): e1[i]*e2[j] at i*f3+j
        w_pairs = slab_ref[o_wp:o_wp + f3 * f3, 0:k]           # (f3*f3, k): W[i,j,k] at row i*f3+j
        scoring = jnp.dot(outer, w_pairs, preferred_element_type=F32)      # (1, k)

        block = (jnp.dot(e1, slab_ref[o_wb1t:o_wb1t + f3, 0:k], preferred_element_type=F32) +
                 jnp.dot(e2, slab_ref[o_wb2t:o_wb2t + f3, 0:k], preferred_element_type=F32))
        s = jnp.maximum(scoring + block + slab_ref[o_ntnb:o_ntnb + 1, 0:k], 0.0)   # (1, k)

        # ---- 2-layer MLP head ----
        hfc = jnp.maximum(
            jnp.dot(s, slab_ref[o_fc1w:o_fc1w + k, 0:bn], preferred_element_type=F32)
            + slab_ref[o_fc1b:o_fc1b + 1, 0:bn], 0.0)                              # (1, bn)
        logit = (jnp.sum(hfc * slab_ref[o_fc2w:o_fc2w + 1, 0:bn], axis=1, keepdims=True)
                 + slab_ref[o_fc2b:o_fc2b + 1, 0:1])                               # (1, 1)
        out_ref[...] = _sigmoid(logit)

    @jax.jit
    def forward(n_counts, adj_bd, x_bd, w1b, w2b, w3, r12, slab):
        return pl.pallas_call(
            kernel,
            out_shape=jax.ShapeDtypeStruct((1, 1), F32),
            in_specs=[pl.BlockSpec(memory_space=pltpu.MemorySpace.SMEM)]
                     + [pl.BlockSpec(memory_space=pltpu.MemorySpace.VMEM)] * 7,
            out_specs=pl.BlockSpec(memory_space=pltpu.MemorySpace.VMEM),
        )(n_counts, adj_bd, x_bd, w1b, w2b, w3, r12, slab)

    return forward


# ------------------------------- packing helpers --------------------------------

def pack_slab(pieces, width):
    """Stack small 2-D params into one (rows, width) f32 slab.

    Each piece is zero-padded to `width` lanes and its row offset aligned to the f32
    sublane tile (8), so every in-kernel static slice is tile-aligned."""
    bufs, offsets, row = [], [], 0
    for p in pieces:
        pr, pc = p.shape
        pr_pad = ((pr + 7) // 8) * 8
        buf = jnp.zeros((pr_pad, width), F32).at[:pr, :pc].set(p.astype(F32))
        bufs.append(buf)
        offsets.append(row)
        row += pr_pad
    return jnp.concatenate(bufs, axis=0), tuple(offsets)


# --------------------------- pure-JAX reference ------------------------------

def simgnn_reference(data, tp, args):
    f3, k = args["filters_3"], args["tensor_neurons"]

    def gcn(a, x):
        h = jnp.maximum(a @ (x @ tp["w1"]) + tp["b1"], 0.0)
        h = jnp.maximum(a @ (h @ tp["w2"]) + tp["b2"], 0.0)
        return a @ (h @ tp["w3"]) + tp["b3"]

    def att(emb):
        ctx = jnp.mean(emb @ tp["w_att"], axis=0)
        sc = jax.nn.sigmoid(emb @ jnp.tanh(ctx)[:, None])
        return emb.T @ sc                                        # (f3, 1)

    p1 = att(gcn(data["adj_1"], data["features_1"]))
    p2 = att(gcn(data["adj_2"], data["features_2"]))
    scoring = (p1.T @ tp["w_ntn"].reshape(f3, f3 * k)).reshape(f3, k)
    scoring = scoring.T @ p2                                     # (k, 1)
    block = tp["w_block"] @ jnp.concatenate([p1, p2], axis=0)
    s = jnp.maximum(scoring + block + tp["ntn_bias"], 0.0).T     # (1, k)
    h = jnp.maximum(s @ tp["fc1_w"].T + tp["fc1_b"], 0.0)
    return jax.nn.sigmoid(h @ tp["fc2_w"].T + tp["fc2_b"])


# ----------------------------- setup helpers ---------------------------------

def glorot(key, shape):
    limit = (6.0 / (shape[0] + shape[-1])) ** 0.5
    return jax.random.uniform(key, shape, F32, -limit, limit)


def ring_edge_index(n):
    src = jnp.arange(n)
    dst = (src + 1) % n
    return jnp.stack([jnp.concatenate([src, dst]), jnp.concatenate([dst, src])])


def normalized_adjacency(edge_index, n):
    """GCNConv normalization: D^-1/2 (A + I) D^-1/2 (dense)."""
    a = jnp.zeros((n, n), F32).at[edge_index[1], edge_index[0]].set(1.0)
    a = a + jnp.eye(n, dtype=F32)
    dinv = jax.lax.rsqrt(jnp.sum(a, axis=1))
    return a * dinv[:, None] * dinv[None, :]


if __name__ == "__main__":
    args = dict(filters_1=64, filters_2=32, filters_3=16, tensor_neurons=16,
                bottle_neck_neurons=16, bins=16, histogram=False, dropout=0.0)
    num_nodes_id = 8          # node-label (one-hot) feature dimension
    n1, n2 = 12, 10
    NPAD = 16                 # per-graph node count padded to a sublane multiple

    f1, f2, f3 = args["filters_1"], args["filters_2"], args["filters_3"]
    k, bn = args["tensor_neurons"], args["bottle_neck_neurons"]

    key = jax.random.PRNGKey(0)
    ks = jax.random.split(key, 16)

    # torch-layout parameters (feature_count == tensor_neurons since histogram=False)
    tp = dict(
        w1=glorot(ks[0], (num_nodes_id, f1)), b1=0.1 * glorot(ks[1], (1, f1)),
        w2=glorot(ks[2], (f1, f2)),           b2=0.1 * glorot(ks[3], (1, f2)),
        w3=glorot(ks[4], (f2, f3)),           b3=0.1 * glorot(ks[5], (1, f3)),
        w_att=glorot(ks[6], (f3, f3)),
        w_ntn=glorot(ks[7], (f3, f3, k)),
        w_block=glorot(ks[8], (k, 2 * f3)),
        ntn_bias=glorot(ks[9], (k, 1)),
        fc1_w=glorot(ks[10], (bn, k)),
        fc1_b=glorot(ks[11], (1, bn)),
        fc2_w=glorot(ks[12], (1, bn)),
        fc2_b=glorot(ks[13], (1, 1)),
    )

    # graphs
    ei1, ei2 = ring_edge_index(n1), ring_edge_index(n2)
    labels1 = jax.random.randint(ks[14], (n1,), 0, num_nodes_id)
    labels2 = jax.random.randint(ks[15], (n2,), 0, num_nodes_id)
    data = dict(
        features_1=jax.nn.one_hot(labels1, num_nodes_id, dtype=F32),
        features_2=jax.nn.one_hot(labels2, num_nodes_id, dtype=F32),
        adj_1=normalized_adjacency(ei1, n1),
        adj_2=normalized_adjacency(ei2, n2),
    )

    # ---- pack kernel inputs ----
    # block-diagonal normalized adjacency + stacked features, zero-padded to NPAD per graph
    adj_bd = jnp.zeros((2 * NPAD, 2 * NPAD), F32)
    adj_bd = adj_bd.at[:n1, :n1].set(data["adj_1"])
    adj_bd = adj_bd.at[NPAD:NPAD + n2, NPAD:NPAD + n2].set(data["adj_2"])
    x_bd = jnp.zeros((2 * NPAD, num_nodes_id), F32)
    x_bd = x_bd.at[:n1, :].set(data["features_1"])
    x_bd = x_bd.at[NPAD:NPAD + n2, :].set(data["features_2"])
    n_counts = jnp.array([n1, n2], jnp.int32)          # true node counts -> SMEM

    # biases b1/b2 ride as an extra row of their weight matrices
    w1b = jnp.concatenate([tp["w1"], tp["b1"]], axis=0)          # (nid+1, f1)
    w2b = jnp.concatenate([tp["w2"], tp["b2"]], axis=0)          # (f1+1, f2)

    # constant replication matrices for the reshape-free NTN bilinear form
    r1 = jnp.kron(jnp.eye(f3, dtype=F32), jnp.ones((1, f3), F32))   # e1 -> repeat each element f3x
    r2 = jnp.kron(jnp.ones((1, f3), F32), jnp.eye(f3, dtype=F32))   # e2 -> tile f3x
    r12 = jnp.concatenate([r1, r2], axis=0)                         # (2*f3, f3*f3)

    slab, offs = pack_slab(
        [tp["w_att"],                                  # (f3, f3)
         tp["w_block"][:, :f3].T,                      # (f3, k)
         tp["w_block"][:, f3:].T,                      # (f3, k)
         tp["fc1_w"].T,                                # (k, bn)
         tp["w_ntn"].reshape(f3 * f3, k),              # (f3*f3, k)  W[i,j,k] at row i*f3+j
         tp["b3"], tp["ntn_bias"].T, tp["fc1_b"], tp["fc2_w"], tp["fc2_b"]],
        width=max(f3, k, bn))

    dims = dict(num_nodes_id=num_nodes_id, filters_1=f1, filters_2=f2, filters_3=f3,
                tensor_neurons=k, bottle_neck_neurons=bn, n_pad=NPAD)
    forward = build_simgnn_forward(dims, offs)

    score = jax.block_until_ready(
        forward(n_counts, adj_bd, x_bd, w1b, w2b, tp["w3"], r12, slab))
    ref = simgnn_reference(data, tp, args)

    assert score.shape == (1, 1), score.shape
    assert jnp.allclose(score, ref, atol=1e-2), (score, ref)
    print("KERNEL_OK")
</pallas_src>

<mosaic_0001>
module attributes {stable_mosaic.version = 11 : i64} {
  func.func @kernel(%arg0: memref<2xi32, #tpu.memory_space<smem>>, %arg1: memref<32x32xf32, #tpu.memory_space<vmem>>, %arg2: memref<32x8xf32, #tpu.memory_space<vmem>>, %arg3: memref<9x64xf32, #tpu.memory_space<vmem>>, %arg4: memref<65x32xf32, #tpu.memory_space<vmem>>, %arg5: memref<32x16xf32, #tpu.memory_space<vmem>>, %arg6: memref<32x256xf32, #tpu.memory_space<vmem>>, %arg7: memref<360x16xf32, #tpu.memory_space<vmem>>, %arg8: memref<1x1xf32, #tpu.memory_space<vmem>>) attributes {dimension_semantics = [], scalar_prefetch = 0 : i64, scratch_operands = 0 : i64, tpu.core_type = #tpu.core_type<tc>} {
    %c0 = arith.constant 0 : index
    %c0_0 = arith.constant 0 : index
    %0 = vector.load %arg1[%c0, %c0_0] : memref<32x32xf32, #tpu.memory_space<vmem>>, vector<32x32xf32>
    %c0_1 = arith.constant 0 : index
    %c0_2 = arith.constant 0 : index
    %1 = vector.load %arg2[%c0_1, %c0_2] : memref<32x8xf32, #tpu.memory_space<vmem>>, vector<32x8xf32>
    %c0_3 = arith.constant 0 : index
    %c0_4 = arith.constant 0 : index
    %2 = vector.load %arg3[%c0_3, %c0_4] : memref<9x64xf32, #tpu.memory_space<vmem>>, vector<8x64xf32>
    %cst = arith.constant dense<0.000000e+00> : vector<32x64xf32>
    %3 = tpu.matmul %1, %2, %cst {dimension_numbers = #tpu.dot_dimension_numbers<[1], [0], [0], [1], [0, 0, 1, 1], [], []>} : vector<32x8xf32>, vector<8x64xf32>, vector<32x64xf32> -> vector<32x64xf32>
    %cst_5 = arith.constant dense<0.000000e+00> : vector<32x64xf32>
    %4 = tpu.matmul %0, %3, %cst_5 {dimension_numbers = #tpu.dot_dimension_numbers<[1], [0], [0], [1], [0, 0, 1, 1], [], []>} : vector<32x32xf32>, vector<32x64xf32>, vector<32x64xf32> -> vector<32x64xf32>
    %c8 = arith.constant 8 : index
    %c0_6 = arith.constant 0 : index
    %5 = vector.load %arg3[%c8, %c0_6] : memref<9x64xf32, #tpu.memory_space<vmem>>, vector<1x64xf32>
    %6 = vector.broadcast %5 : vector<1x64xf32> to vector<32x64xf32>
    %7 = arith.addf %4, %6 : vector<32x64xf32>
    %cst_7 = arith.constant 0.000000e+00 : f32
    %8 = vector.broadcast %cst_7 : f32 to vector<32x64xf32>
    %9 = arith.maximumf %7, %8 : vector<32x64xf32>
    %c0_8 = arith.constant 0 : index
    %c0_9 = arith.constant 0 : index
    %10 = vector.load %arg4[%c0_8, %c0_9] : memref<65x32xf32, #tpu.memory_space<vmem>>, vector<64x32xf32>
    %cst_10 = arith.constant dense<0.000000e+00> : vector<32x32xf32>
    %11 = tpu.matmul %9, %10, %cst_10 {dimension_numbers = #tpu.dot_dimension_numbers<[1], [0], [0], [1], [0, 0, 1, 1], [], []>} : vector<32x64xf32>, vector<64x32xf32>, vector<32x32xf32> -> vector<32x32xf32>
    %cst_11 = arith.constant dense<0.000000e+00> : vector<32x32xf32>
    %12 = tpu.matmul %0, %11, %cst_11 {dimension_numbers = #tpu.dot_dimension_numbers<[1], [0], [0], [1], [0, 0, 1, 1], [], []>} : vector<32x32xf32>, vector<32x32xf32>, vector<32x32xf32> -> vector<32x32xf32>
    %c64 = arith.constant 64 : index
    %c0_12 = arith.constant 0 : index
    %13 = vector.load %arg4[%c64, %c0_12] : memref<65x32xf32, #tpu.memory_space<vmem>>, vector<1x32xf32>
    %14 = vector.broadcast %13 : vector<1x32xf32> to vector<32x32xf32>
    %15 = arith.addf %12, %14 : vector<32x32xf32>
    %cst_13 = arith.constant 0.000000e+00 : f32
    %16 = vector.broadcast %cst_13 : f32 to vector<32x32xf32>
    %17 = arith.maximumf %15, %16 : vector<32x32xf32>
    %c0_14 = arith.constant 0 : index
    %c0_15 = arith.constant 0 : index
    %18 = vector.load %arg5[%c0_14, %c0_15] : memref<32x16xf32, #tpu.memory_space<vmem>>, vector<32x16xf32>
    %cst_16 = arith.constant dense<0.000000e+00> : vector<32x16xf32>
    %19 = tpu.matmul %17, %18, %cst_16 {dimension_numbers = #tpu.dot_dimension_numbers<[1], [0], [0], [1], [0, 0, 1, 1], [], []>} : vector<32x32xf32>, vector<32x16xf32>, vector<32x16xf32> -> vector<32x16xf32>
    %cst_17 = arith.constant dense<0.000000e+00> : vector<32x16xf32>
    %20 = tpu.matmul %0, %19, %cst_17 {dimension_numbers = #tpu.dot_dimension_numbers<[1], [0], [0], [1], [0, 0, 1, 1], [], []>} : vector<32x32xf32>, vector<32x16xf32>, vector<32x16xf32> -> vector<32x16xf32>
    %c320 = arith.constant 320 : index
    %c0_18 = arith.constant 0 : index
    %21 = vector.load %arg7[%c320, %c0_18] : memref<360x16xf32, #tpu.memory_space<vmem>>, vector<1x16xf32>
    %22 = vector.broadcast %21 : vector<1x16xf32> to vector<32x16xf32>
    %23 = arith.addf %20, %22 : vector<32x16xf32>
    %c0_19 = arith.constant 0 : index
    %c0_20 = arith.constant 0 : index
    %24 = vector.load %arg7[%c0_19, %c0_20] : memref<360x16xf32, #tpu.memory_space<vmem>>, vector<16x16xf32>
    %25 = tpu.iota {dimensions = array<i32: 0>} : vector<16x1xi32>
    %26 = vector.extract_strided_slice %23 {offsets = [0, 0], sizes = [16, 16], strides = [1, 1]} : vector<32x16xf32> to vector<16x16xf32>
    %c0_21 = arith.constant 0 : index
    %27 = memref.load %arg0[%c0_21] : memref<2xi32, #tpu.memory_space<smem>>
    %28 = vector.broadcast %27 : i32 to vector<16x1xi32>
    %29 = arith.cmpi slt, %25, %28 : vector<16x1xi32>
    %30 = arith.extui %29 : vector<16x1xi1> to vector<16x1xi32>
    %31 = arith.sitofp %30 : vector<16x1xi32> to vector<16x1xf32>
    %32 = vector.broadcast %31 : vector<16x1xf32> to vector<16x16xf32>
    %33 = arith.mulf %26, %32 : vector<16x16xf32>
    %cst_22 = arith.constant dense<0.000000e+00> : vector<16x16xf32>
    %34 = tpu.matmul %33, %24, %cst_22 {dimension_numbers = #tpu.dot_dimension_numbers<[1], [0], [0], [1], [0, 0, 1, 1], [], []>} : vector<16x16xf32>, vector<16x16xf32>, vector<16x16xf32> -> vector<16x16xf32>
    %cst_23 = arith.constant dense<0.000000e+00> : vector<16xf32>
    %35 = vector.multi_reduction <add>, %34, %cst_23 [0] : vector<16x16xf32> to vector<16xf32>
    %36 = vector.shape_cast %35 : vector<16xf32> to vector<1x16xf32>
    %37 = arith.sitofp %27 : i32 to f32
    %38 = vector.broadcast %37 : f32 to vector<1x16xf32>
    %39 = arith.divf %36, %38 : vector<1x16xf32>
    %40 = math.tanh %39 : vector<1x16xf32>
    %41 = vector.broadcast %40 : vector<1x16xf32> to vector<16x16xf32>
    %42 = arith.mulf %26, %41 : vector<16x16xf32>
    %cst_24 = arith.constant dense<0.000000e+00> : vector<16xf32>
    %43 = vector.multi_reduction <add>, %42, %cst_24 [1] : vector<16x16xf32> to vector<16xf32>
    %44 = vector.shape_cast %43 : vector<16xf32> to vector<16x1xf32>
    %cst_25 = arith.constant 0.000000e+00 : f32
    %45 = vector.broadcast %cst_25 : f32 to vector<16x1xf32>
    %46 = arith.subf %45, %44 : vector<16x1xf32>
    %47 = math.exp %46 : vector<16x1xf32>
    %cst_26 = arith.constant 1.000000e+00 : f32
    %48 = vector.broadcast %cst_26 : f32 to vector<16x1xf32>
    %49 = arith.addf %48, %47 : vector<16x1xf32>
    %50 = tpu.reciprocal %49 {approx = true} : vector<16x1xf32> -> vector<16x1xf32>
    %51 = vector.broadcast %50 : vector<16x1xf32> to vector<16x16xf32>
    %52 = arith.mulf %33, %51 : vector<16x16xf32>
    %cst_27 = arith.constant dense<0.000000e+00> : vector<16xf32>
    %53 = vector.multi_reduction <add>, %52, %cst_27 [0] : vector<16x16xf32> to vector<16xf32>
    %54 = vector.shape_cast %53 : vector<16xf32> to vector<1x16xf32>
    %55 = vector.extract_strided_slice %23 {offsets = [16, 0], sizes = [16, 16], strides = [1, 1]} : vector<32x16xf32> to vector<16x16xf32>
    %c1 = arith.constant 1 : index
    %56 = memref.load %arg0[%c1] : memref<2xi32, #tpu.memory_space<smem>>
    %57 = vector.broadcast %56 : i32 to vector<16x1xi32>
    %58 = arith.cmpi slt, %25, %57 : vector<16x1xi32>
    %59 = arith.extui %58 : vector<16x1xi1> to vector<16x1xi32>
    %60 = arith.sitofp %59 : vector<16x1xi32> to vector<16x1xf32>
    %61 = vector.broadcast %60 : vector<16x1xf32> to vector<16x16xf32>
    %62 = arith.mulf %55, %61 : vector<16x16xf32>
    %cst_28 = arith.constant dense<0.000000e+00> : vector<16x16xf32>
    %63 = tpu.matmul %62, %24, %cst_28 {dimension_numbers = #tpu.dot_dimension_numbers<[1], [0], [0], [1], [0, 0, 1, 1], [], []>} : vector<16x16xf32>, vector<16x16xf32>, vector<16x16xf32> -> vector<16x16xf32>
    %cst_29 = arith.constant dense<0.000000e+00> : vector<16xf32>
    %64 = vector.multi_reduction <add>, %63, %cst_29 [0] : vector<16x16xf32> to vector<16xf32>
    %65 = vector.shape_cast %64 : vector<16xf32> to vector<1x16xf32>
    %66 = arith.sitofp %56 : i32 to f32
    %67 = vector.broadcast %66 : f32 to vector<1x16xf32>
    %68 = arith.divf %65, %67 : vector<1x16xf32>
    %69 = math.tanh %68 : vector<1x16xf32>
    %70 = vector.broadcast %69 : vector<1x16xf32> to vector<16x16xf32>
    %71 = arith.mulf %55, %70 : vector<16x16xf32>
    %cst_30 = arith.constant dense<0.000000e+00> : vector<16xf32>
    %72 = vector.multi_reduction <add>, %71, %cst_30 [1] : vector<16x16xf32> to vector<16xf32>
    %73 = vector.shape_cast %72 : vector<16xf32> to vector<16x1xf32>
    %cst_31 = arith.constant 0.000000e+00 : f32
    %74 = vector.broadcast %cst_31 : f32 to vector<16x1xf32>
    %75 = arith.subf %74, %73 : vector<16x1xf32>
    %76 = math.exp %75 : vector<16x1xf32>
    %cst_32 = arith.constant 1.000000e+00 : f32
    %77 = vector.broadcast %cst_32 : f32 to vector<16x1xf32>
    %78 = arith.addf %77, %76 : vector<16x1xf32>
    %79 = tpu.reciprocal %78 {approx = true} : vector<16x1xf32> -> vector<16x1xf32>
    %80 = vector.broadcast %79 : vector<16x1xf32> to vector<16x16xf32>
    %81 = arith.mulf %62, %80 : vector<16x16xf32>
    %cst_33 = arith.constant dense<0.000000e+00> : vector<16xf32>
    %82 = vector.multi_reduction <add>, %81, %cst_33 [0] : vector<16x16xf32> to vector<16xf32>
    %83 = vector.shape_cast %82 : vector<16xf32> to vector<1x16xf32>
    %c0_34 = arith.constant 0 : index
    %c0_35 = arith.constant 0 : index
    %84 = vector.load %arg6[%c0_34, %c0_35] : memref<32x256xf32, #tpu.memory_space<vmem>>, vector<16x256xf32>
    %c16 = arith.constant 16 : index
    %c0_36 = arith.constant 0 : index
    %85 = vector.load %arg6[%c16, %c0_36] : memref<32x256xf32, #tpu.memory_space<vmem>>, vector<16x256xf32>
    %cst_37 = arith.constant dense<0.000000e+00> : vector<1x256xf32>
    %86 = tpu.matmul %54, %84, %cst_37 {dimension_numbers = #tpu.dot_dimension_numbers<[1], [0], [0], [1], [0, 0, 1, 1], [], []>} : vector<1x16xf32>, vector<16x256xf32>, vector<1x256xf32> -> vector<1x256xf32>
    %cst_38 = arith.constant dense<0.000000e+00> : vector<1x256xf32>
    %87 = tpu.matmul %83, %85, %cst_38 {dimension_numbers = #tpu.dot_dimension_numbers<[1], [0], [0], [1], [0, 0, 1, 1], [], []>} : vector<1x16xf32>, vector<16x256xf32>, vector<1x256xf32> -> vector<1x256xf32>
    %88 = arith.mulf %86, %87 : vector<1x256xf32>
    %c64_39 = arith.constant 64 : index
    %c0_40 = arith.constant 0 : index
    %89 = vector.load %arg7[%c64_39, %c0_40] : memref<360x16xf32, #tpu.memory_space<vmem>>, vector<256x16xf32>
    %cst_41 = arith.constant dense<0.000000e+00> : vector<1x16xf32>
    %90 = tpu.matmul %88, %89, %cst_41 {dimension_numbers = #tpu.dot_dimension_numbers<[1], [0], [0], [1], [0, 0, 1, 1], [], []>} : vector<1x256xf32>, vector<256x16xf32>, vector<1x16xf32> -> vector<1x16xf32>
    %c16_42 = arith.constant 16 : index
    %c0_43 = arith.constant 0 : index
    %91 = vector.load %arg7[%c16_42, %c0_43] : memref<360x16xf32, #tpu.memory_space<vmem>>, vector<16x16xf32>
    %cst_44 = arith.constant dense<0.000000e+00> : vector<1x16xf32>
    %92 = tpu.matmul %54, %91, %cst_44 {dimension_numbers = #tpu.dot_dimension_numbers<[1], [0], [0], [1], [0, 0, 1, 1], [], []>} : vector<1x16xf32>, vector<16x16xf32>, vector<1x16xf32> -> vector<1x16xf32>
    %c32 = arith.constant 32 : index
    %c0_45 = arith.constant 0 : index
    %93 = vector.load %arg7[%c32, %c0_45] : memref<360x16xf32, #tpu.memory_space<vmem>>, vector<16x16xf32>
    %cst_46 = arith.constant dense<0.000000e+00> : vector<1x16xf32>
    %94 = tpu.matmul %83, %93, %cst_46 {dimension_numbers = #tpu.dot_dimension_numbers<[1], [0], [0], [1], [0, 0, 1, 1], [], []>} : vector<1x16xf32>, vector<16x16xf32>, vector<1x16xf32> -> vector<1x16xf32>
    %95 = arith.addf %92, %94 : vector<1x16xf32>
    %96 = arith.addf %90, %95 : vector<1x16xf32>
    %c328 = arith.constant 328 : index
    %c0_47 = arith.constant 0 : index
    %97 = vector.load %arg7[%c328, %c0_47] : memref<360x16xf32, #tpu.memory_space<vmem>>, vector<1x16xf32>
    %98 = arith.addf %96, %97 : vector<1x16xf32>
    %cst_48 = arith.constant 0.000000e+00 : f32
    %99 = vector.broadcast %cst_48 : f32 to vector<1x16xf32>
    %100 = arith.maximumf %98, %99 : vector<1x16xf32>
    %c48 = arith.constant 48 : index
    %c0_49 = arith.constant 0 : index
    %101 = vector.load %arg7[%c48, %c0_49] : memref<360x16xf32, #tpu.memory_space<vmem>>, vector<16x16xf32>
    %cst_50 = arith.constant dense<0.000000e+00> : vector<1x16xf32>
    %102 = tpu.matmul %100, %101, %cst_50 {dimension_numbers = #tpu.dot_dimension_numbers<[1], [0], [0], [1], [0, 0, 1, 1], [], []>} : vector<1x16xf32>, vector<16x16xf32>, vector<1x16xf32> -> vector<1x16xf32>
    %c336 = arith.constant 336 : index
    %c0_51 = arith.constant 0 : index
    %103 = vector.load %arg7[%c336, %c0_51] : memref<360x16xf32, #tpu.memory_space<vmem>>, vector<1x16xf32>
    %104 = arith.addf %102, %103 : vector<1x16xf32>
    %cst_52 = arith.constant 0.000000e+00 : f32
    %105 = vector.broadcast %cst_52 : f32 to vector<1x16xf32>
    %106 = arith.maximumf %104, %105 : vector<1x16xf32>
    %c344 = arith.constant 344 : index
    %c0_53 = arith.constant 0 : index
    %107 = vector.load %arg7[%c344, %c0_53] : memref<360x16xf32, #tpu.memory_space<vmem>>, vector<1x16xf32>
    %108 = arith.mulf %106, %107 : vector<1x16xf32>
    %cst_54 = arith.constant dense<0.000000e+00> : vector<1xf32>
    %109 = vector.multi_reduction <add>, %108, %cst_54 [1] : vector<1x16xf32> to vector<1xf32>
    %110 = vector.shape_cast %109 : vector<1xf32> to vector<1x1xf32>
    %c352 = arith.constant 352 : index
    %c0_55 = arith.constant 0 : index
    %111 = vector.load %arg7[%c352, %c0_55] : memref<360x16xf32, #tpu.memory_space<vmem>>, vector<1x1xf32>
    %112 = arith.addf %110, %111 : vector<1x1xf32>
    %cst_56 = arith.constant 0.000000e+00 : f32
    %113 = vector.broadcast %cst_56 : f32 to vector<1x1xf32>
    %114 = arith.subf %113, %112 : vector<1x1xf32>
    %115 = math.exp %114 : vector<1x1xf32>
    %cst_57 = arith.constant 1.000000e+00 : f32
    %116 = vector.broadcast %cst_57 : f32 to vector<1x1xf32>
    %117 = arith.addf %116, %115 : vector<1x1xf32>
    %118 = tpu.reciprocal %117 {approx = true} : vector<1x1xf32> -> vector<1x1xf32>
    %c0_58 = arith.constant 0 : index
    %c0_59 = arith.constant 0 : index
    %119 = vector.load %arg8[%c0_58, %c0_59] : memref<1x1xf32, #tpu.memory_space<vmem>>, vector<1x1xf32>
    tpu.vector_store %arg8[%c0_58, %c0_59], %118 {strides = array<i32>} : memref<1x1xf32, #tpu.memory_space<vmem>>, vector<1x1xf32>,
    return
  }
}

</mosaic_0001>

<llo_original>
// kernel: forward.1
$region0: #{forward.1}
  #allocation0 [shape = 'u32[]', space=smem, size = 0x4, offset = 0x4, fixed_abs, tag = 'smem constant byte address 0x4 - core index']
  #allocation1 [shape = 'u32[144,128]{1,0:T(1,128)}', space=vmem, size = 0x12000, scoped, tag = 'internal scratch']
  %s0 = inlined_call_operand.vmem [shape: s32[2], index: 0, kind: input, shape index: {}]
  %s1 = inlined_call_operand.vmem [shape: f32[32,32], index: 1, kind: input, shape index: {}]
  %s2 = inlined_call_operand.vmem [shape: f32[32,8], index: 2, kind: input, shape index: {}]
  %s3 = inlined_call_operand.vmem [shape: f32[9,64], index: 3, kind: input, shape index: {}]
  %s4 = inlined_call_operand.vmem [shape: f32[65,32], index: 4, kind: input, shape index: {}]
  %s5 = inlined_call_operand.vmem [shape: f32[32,16], index: 5, kind: input, shape index: {}]
  %s6 = inlined_call_operand.vmem [shape: f32[32,256], index: 6, kind: input, shape index: {}]
  %s7 = inlined_call_operand.vmem [shape: f32[360,16], index: 7, kind: input, shape index: {}]
  %s8 = inlined_call_operand.hbm [shape: f32[1,1], index: 8, kind: output, shape index: {}]
  %s9 = sld [smem:[#allocation0]]
  $region46: #{forward.1} parent=0
    _
  %s11 = ssub.s32 1, %s9
  %s12 = scalar_select 0, %s11, %s9
  $region1: #{forward.1} parent=0
    #allocation2 [shape = 'u8[512]{0}', space=smem, size = 0x200, scoped, tag = 'input window, operand 0, single buffered']
    #allocation3 [shape = 's32[1]{0}', space=sflag, size = 0x4, scoped, tag = 'scoped memory for forward.1']
    #allocation4 [shape = 's32[1]{0}', space=sflag, size = 0x4, scoped, tag = 'scoped memory for forward.1']
    #allocation5 [shape = 'u8[512]{0}', space=vmem, size = 0x400, scoped, tag = 'output window, operand 0, single buffered']
    %13 = vsyncpa [#allocation4], 0
    %14 = vsyncpa [#allocation3], 0
    // Predicated region
    $region2: #{forward.1} parent=1 // pred_check
      _
    $region3: #{forward.1} parent=1 // pred_check_branch
      %16 = sbr.rel (0) target = $region5
    $region4: #{forward.1} parent=1 // pred_region
      %s18 = ssub.s32 16, 16
      %19 = vsyncadd [#allocation4], %s18
      %s21 = sshll.u32 %s0, 4
      %s22 = int_to_ptr.vmem [resolvable:$true] %s21
      %24 = dma.vmem_to_smem %s22, 16, [#allocation2], [#allocation4]
    $region5: #{forward.1} parent=1 // pred_fallthru
      _
    // Predicated region
    $region6: #{forward.1} parent=1 // pred_check
      _
    $region7: #{forward.1} parent=1 // pred_check_branch
      %26 = sbr.rel (0) target = $region9
    $region8: #{forward.1} parent=1 // pred_region
      _
    $region9: #{forward.1} parent=1 // pred_fallthru
      _
    // Predicated region
    $region10: #{forward.1} parent=1 // pred_check
      _
    $region11: #{forward.1} parent=1 // pred_check_branch
      %28 = sbr.rel (0) target = $region13
    $region12: #{forward.1} parent=1 // pred_region
      _
    $region13: #{forward.1} parent=1 // pred_fallthru
      _
    // Predicated region
    $region14: #{forward.1} parent=1 // pred_check
      _
    $region15: #{forward.1} parent=1 // pred_check_branch
      %30 = sbr.rel (0) target = $region17
    $region16: #{forward.1} parent=1 // pred_region
      _
    $region17: #{forward.1} parent=1 // pred_fallthru
      _
    // Predicated region
    $region18: #{forward.1} parent=1 // pred_check
      _
    $region19: #{forward.1} parent=1 // pred_check_branch
      %32 = sbr.rel (0) target = $region21
    $region20: #{forward.1} parent=1 // pred_region
      _
    $region21: #{forward.1} parent=1 // pred_fallthru
      _
    // Predicated region
    $region22: #{forward.1} parent=1 // pred_check
      _
    $region23: #{forward.1} parent=1 // pred_check_branch
      %34 = sbr.rel (0) target = $region25
    $region24: #{forward.1} parent=1 // pred_region
      _
    $region25: #{forward.1} parent=1 // pred_fallthru
      _
    // Predicated region
    $region26: #{forward.1} parent=1 // pred_check
      _
    $region27: #{forward.1} parent=1 // pred_check_branch
      %36 = sbr.rel (0) target = $region29
    $region28: #{forward.1} parent=1 // pred_region
      _
    $region29: #{forward.1} parent=1 // pred_fallthru
      _
    // Predicated region
    $region30: #{forward.1} parent=1 // pred_check
      _
    $region31: #{forward.1} parent=1 // pred_check_branch
      %38 = sbr.rel (0) target = $region33
    $region32: #{forward.1} parent=1 // pred_region
      _
    $region33: #{forward.1} parent=1 // pred_fallthru
      _
    // Predicated region
    $region34: #{forward.1} parent=1 // pred_check
      _
    $region35: #{forward.1} parent=1 // pred_check_branch
      %40 = sbr.rel (0) target = $region37
    $region36: #{forward.1} parent=1 // pred_region
      %41 = dma.done [#allocation4], 16
    $region37: #{forward.1} parent=1 // pred_fallthru
      _
    %42 = sfence
    %v43 = vld [vmem:[%s1] sm:$0xff]
    %v44 = vld [vmem:[%s1 + $0x8] sm:$0xff]
    %v45 = vld [vmem:[%s1 + $0x10] sm:$0xff]
    %v46 = vld [vmem:[%s1 + $0x18] sm:$0xff]
    %v47 = vld [vmem:[%s2] sm:$0xff]
    %v48 = vld [vmem:[%s2 + $0x8] sm:$0xff]
    %v49 = vld [vmem:[%s2 + $0x10] sm:$0xff]
    %v50 = vld [vmem:[%s2 + $0x18] sm:$0xff]
    %v51 = vld [vmem:[%s3] sm:$0xff]
    %vm52 = vcmask 64512
    %v54 = vsel %vm52, %v47, 0
    %v57 = vsel %vm52, %v48, 0
    %v60 = vsel %vm52, %v49, 0
    %v63 = vsel %vm52, %v50, 0
    %65 = vmatprep.subr.mxu0 0.0
    %66 = vmatpush1.msra.mxu0 %v51
    %67 = vmatprep.subr.mxu0 0.0
    %68 = vmatpush1.msra.mxu0 0.0
    %69 = vmatprep.subr.mxu0 0.0
    %70 = vmatpush1.msra.mxu0 0.0
    %71 = vmatprep.subr.mxu0 0.0
    %72 = vmatpush1.msra.mxu0 0.0
    %73 = vmatprep.subr.mxu0 0.0
    %74 = vmatpush1.msra.mxu0 0.0
    %75 = vmatprep.subr.mxu0 0.0
    %76 = vmatpush1.msra.mxu0 0.0
    %77 = vmatprep.subr.mxu0 0.0
    %78 = vmatpush1.msra.mxu0 0.0
    %79 = vmatprep.subr.mxu0 0.0
    %80 = vmatpush1.msra.mxu0 0.0
    %81 = vmatprep.subr.mxu0 0.0
    %82 = vmatpush1.msra.mxu0 0.0
    %83 = vmatprep.subr.mxu0 0.0
    %84 = vmatpush1.msra.mxu0 0.0
    %85 = vmatprep.subr.mxu0 0.0
    %86 = vmatpush1.msra.mxu0 0.0
    %87 = vmatprep.subr.mxu0 0.0
    %88 = vmatpush1.msra.mxu0 0.0
    %89 = vmatprep.subr.mxu0 0.0
    %90 = vmatpush1.msra.mxu0 0.0
    %91 = vmatprep.subr.mxu0 0.0
    %92 = vmatpush1.msra.mxu0 0.0
    %93 = vmatprep.subr.mxu0 0.0
    %94 = vmatpush1.msra.mxu0 0.0
    %95 = vmatprep.subr.mxu0 0.0
    %96 = vmatpush1.msra.mxu0 0.0
    %97 = vmatprep.subr.mxu0 0.0
    %98 = vmatpush1.msra.mxu0 0.0
    %99 = vmatprep.subr.mxu0 0.0
    %100 = vmatpush1.msra.mxu0 0.0
    %101 = vmatprep.subr.mxu0 0.0
    %102 = vmatpush1.msra.mxu0 0.0
    %103 = vmatprep.subr.mxu0 0.0
    %104 = vmatpush1.msra.mxu0 0.0
    %105 = vmatprep.subr.mxu0 0.0
    %106 = vmatpush1.msra.mxu0 0.0
    %107 = vmatprep.subr.mxu0 0.0
    %108 = vmatpush1.msra.mxu0 0.0
    %109 = vmatprep.subr.mxu0 0.0
    %110 = vmatpush1.msra.mxu0 0.0
    %111 = vmatprep.subr.mxu0 0.0
    %112 = vmatpush1.msra.mxu0 0.0
    %113 = vmatprep.subr.mxu0 0.0
    %114 = vmatpush1.msra.mxu0 0.0
    %115 = vmatprep.subr.mxu0 0.0
    %116 = vmatpush1.msra.mxu0 0.0
    %117 = vmatprep.subr.mxu0 0.0
    %118 = vmatpush1.msra.mxu0 0.0
    %119 = vmatprep.subr.mxu0 0.0
    %120 = vmatpush1.msra.mxu0 0.0
    %121 = vmatprep.subr.mxu0 0.0
    %122 = vmatpush1.msra.mxu0 0.0
    %123 = vmatprep.subr.mxu0 0.0
    %124 = vmatpush1.msra.mxu0 0.0
    %125 = vmatprep.subr.mxu0 0.0
    %126 = vmatpush1.msra.mxu0 0.0
    %127 = vmatprep.subr.mxu0 0.0
    %128 = vmatpush1.msra.mxu0 0.0
    %129 = vmatprep.mubr.f32.mxu0 0.0
    %130 = vmatmul.mubr.f32.gmra.mrb[0].mxu0 %v54
    %v131 = vpop.f32.mrb[0].mxu0
    %v132 = vadd.f32 0.0, %v131
    %v133 = vpop.f32.mrb[0].mxu0
    %134 = vmatprep.mubr.f32.mxu0 0.0
    %135 = vmatmul.mubr.f32.gmra.mrb[0].mxu0 %v57
    %v136 = vpop.f32.mrb[0].mxu0
    %v137 = vadd.f32 0.0, %v136
    %v138 = vpop.f32.mrb[0].mxu0
    %139 = vmatprep.mubr.f32.mxu0 0.0
    %140 = vmatmul.mubr.f32.gmra.mrb[0].mxu0 %v60
    %v141 = vpop.f32.mrb[0].mxu0
    %v142 = vadd.f32 0.0, %v141
    %v143 = vpop.f32.mrb[0].mxu0
    %144 = vmatprep.mubr.f32.mxu0 0.0
    %145 = vmatmul.mubr.f32.gmra.mrb[0].mxu0 %v63
    %v146 = vpop.f32.mrb[0].mxu0
    %v147 = vadd.f32 0.0, %v146
    %v148 = vpop.f32.mrb[0].mxu0
    %149 = vdwg.mxu0
    %v150 = vld [vmem:[%s3 + $0x8] sm:$0x1]
    %v151 = vlaneseq
    %v152 = vshrl.u32 %v151, 7
    %v153 = vsub.s32 0, %v152
    %v154 = vrot.slane %v150, %v153
    %vm155 = vcmask 261120
    %v157 = vsel %vm155, %v43, 0
    %v160 = vsel %vm155, %v44, 0
    %v163 = vsel %vm155, %v45, 0
    %v166 = vsel %vm155, %v46, 0
    %168 = vmatprep.subr.mxu0 0.0
    %169 = vmatpush1.msra.mxu0 %v132
    %170 = vmatprep.subr.mxu0 0.0
    %171 = vmatpush1.msra.mxu0 %v137
    %172 = vmatprep.subr.mxu0 0.0
    %173 = vmatpush1.msra.mxu0 %v142
    %174 = vmatprep.subr.mxu0 0.0
    %175 = vmatpush1.msra.mxu0 %v147
    %176 = vmatprep.subr.mxu0 0.0
    %177 = vmatpush1.msra.mxu0 0.0
    %178 = vmatprep.subr.mxu0 0.0
    %179 = vmatpush1.msra.mxu0 0.0
    %180 = vmatprep.subr.mxu0 0.0
    %181 = vmatpush1.msra.mxu0 0.0
    %182 = vmatprep.subr.mxu0 0.0
    %183 = vmatpush1.msra.mxu0 0.0
    %184 = vmatprep.subr.mxu0 0.0
    %185 = vmatpush1.msra.mxu0 0.0
    %186 = vmatprep.subr.mxu0 0.0
    %187 = vmatpush1.msra.mxu0 0.0
    %188 = vmatprep.subr.mxu0 0.0
    %189 = vmatpush1.msra.mxu0 0.0
    %190 = vmatprep.subr.mxu0 0.0
    %191 = vmatpush1.msra.mxu0 0.0
    %192 = vmatprep.subr.mxu0 0.0
    %193 = vmatpush1.msra.mxu0 0.0
    %194 = vmatprep.subr.mxu0 0.0
    %195 = vmatpush1.msra.mxu0 0.0
    %196 = vmatprep.subr.mxu0 0.0
    %197 = vmatpush1.msra.mxu0 0.0
    %198 = vmatprep.subr.mxu0 0.0
    %199 = vmatpush1.msra.mxu0 0.0
    %200 = vmatprep.subr.mxu0 0.0
    %201 = vmatpush1.msra.mxu0 0.0
    %202 = vmatprep.subr.mxu0 0.0
    %203 = vmatpush1.msra.mxu0 0.0
    %204 = vmatprep.subr.mxu0 0.0
    %205 = vmatpush1.msra.mxu0 0.0
    %206 = vmatprep.subr.mxu0 0.0
    %207 = vmatpush1.msra.mxu0 0.0
    %208 = vmatprep.subr.mxu0 0.0
    %209 = vmatpush1.msra.mxu0 0.0
    %210 = vmatprep.subr.mxu0 0.0
    %211 = vmatpush1.msra.mxu0 0.0
    %212 = vmatprep.subr.mxu0 0.0
    %213 = vmatpush1.msra.mxu0 0.0
    %214 = vmatprep.subr.mxu0 0.0
    %215 = vmatpush1.msra.mxu0 0.0
    %216 = vmatprep.subr.mxu0 0.0
    %217 = vmatpush1.msra.mxu0 0.0
    %218 = vmatprep.subr.mxu0 0.0
    %219 = vmatpush1.msra.mxu0 0.0
    %220 = vmatprep.subr.mxu0 0.0
    %221 = vmatpush1.msra.mxu0 0.0
    %222 = vmatprep.subr.mxu0 0.0
    %223 = vmatpush1.msra.mxu0 0.0
    %224 = vmatprep.subr.mxu0 0.0
    %225 = vmatpush1.msra.mxu0 0.0
    %226 = vmatprep.subr.mxu0 0.0
    %227 = vmatpush1.msra.mxu0 0.0
    %228 = vmatprep.subr.mxu0 0.0
    %229 = vmatpush1.msra.mxu0 0.0
    %230 = vmatprep.subr.mxu0 0.0
    %231 = vmatpush1.msra.mxu0 0.0
    %232 = vmatprep.mubr.f32.mxu0 0.0
    %233 = vmatmul.mubr.f32.gmra.mrb[0].mxu0 %v157
    %v234 = vpop.f32.mrb[0].mxu0
    %v235 = vadd.f32 %v154, %v234
    %v236 = vpop.f32.mrb[0].mxu0
    %237 = vmatprep.mubr.f32.mxu0 0.0
    %238 = vmatmul.mubr.f32.gmra.mrb[0].mxu0 %v160
    %v239 = vpop.f32.mrb[0].mxu0
    %v240 = vadd.f32 %v154, %v239
    %v241 = vpop.f32.mrb[0].mxu0
    %242 = vmatprep.mubr.f32.mxu0 0.0
    %243 = vmatmul.mubr.f32.gmra.mrb[0].mxu0 %v163
    %v244 = vpop.f32.mrb[0].mxu0
    %v245 = vadd.f32 %v154, %v244
    %v246 = vpop.f32.mrb[0].mxu0
    %247 = vmatprep.mubr.f32.mxu0 0.0
    %248 = vmatmul.mubr.f32.gmra.mrb[0].mxu0 %v166
    %v249 = vpop.f32.mrb[0].mxu0
    %v250 = vadd.f32 %v154, %v249
    %v251 = vpop.f32.mrb[0].mxu0
    %252 = vdwg.mxu0
    %v253 = vmax.f32 %v235, 0.0
    %v254 = vmax.f32 %v240, 0.0
    %v255 = vmax.f32 %v245, 0.0
    %v256 = vmax.f32 %v250, 0.0
    %v257 = vld [vmem:[%s4] sm:$0xff]
    %v258 = vld [vmem:[%s4 + $0x8] sm:$0xff]
    %v259 = vld [vmem:[%s4 + $0x10] sm:$0xff]
    %v260 = vld [vmem:[%s4 + $0x18] sm:$0xff]
    %v261 = vld [vmem:[%s4 + $0x20] sm:$0xff]
    %v262 = vld [vmem:[%s4 + $0x28] sm:$0xff]
    %v263 = vld [vmem:[%s4 + $0x30] sm:$0xff]
    %v264 = vld [vmem:[%s4 + $0x38] sm:$0xff]
    %vm265 = vcmask 523264
    %v267 = vsel %vm265, %v253, 0
    %v270 = vsel %vm265, %v254, 0
    %v273 = vsel %vm265, %v255, 0
    %v276 = vsel %vm265, %v256, 0
    %278 = vmatprep.subr.mxu0 0.0
    %279 = vmatpush1.msra.mxu0 %v257
    %280 = vmatprep.subr.mxu0 0.0
    %281 = vmatpush1.msra.mxu0 %v258
    %282 = vmatprep.subr.mxu0 0.0
    %283 = vmatpush1.msra.mxu0 %v259
    %284 = vmatprep.subr.mxu0 0.0
    %285 = vmatpush1.msra.mxu0 %v260
    %286 = vmatprep.subr.mxu0 0.0
    %287 = vmatpush1.msra.mxu0 %v261
    %288 = vmatprep.subr.mxu0 0.0
    %289 = vmatpush1.msra.mxu0 %v262
    %290 = vmatprep.subr.mxu0 0.0
    %291 = vmatpush1.msra.mxu0 %v263
    %292 = vmatprep.subr.mxu0 0.0
    %293 = vmatpush1.msra.mxu0 %v264
    %294 = vmatprep.subr.mxu0 0.0
    %295 = vmatpush1.msra.mxu0 0.0
    %296 = vmatprep.subr.mxu0 0.0
    %297 = vmatpush1.msra.mxu0 0.0
    %298 = vmatprep.subr.mxu0 0.0
    %299 = vmatpush1.msra.mxu0 0.0
    %300 = vmatprep.subr.mxu0 0.0
    %301 = vmatpush1.msra.mxu0 0.0
    %302 = vmatprep.subr.mxu0 0.0
    %303 = vmatpush1.msra.mxu0 0.0
    %304 = vmatprep.subr.mxu0 0.0
    %305 = vmatpush1.msra.mxu0 0.0
    %306 = vmatprep.subr.mxu0 0.0
    %307 = vmatpush1.msra.mxu0 0.0
    %308 = vmatprep.subr.mxu0 0.0
    %309 = vmatpush1.msra.mxu0 0.0
    %310 = vmatprep.subr.mxu0 0.0
    %311 = vmatpush1.msra.mxu0 0.0
    %312 = vmatprep.subr.mxu0 0.0
    %313 = vmatpush1.msra.mxu0 0.0
    %314 = vmatprep.subr.mxu0 0.0
    %315 = vmatpush1.msra.mxu0 0.0
    %316 = vmatprep.subr.mxu0 0.0
    %317 = vmatpush1.msra.mxu0 0.0
    %318 = vmatprep.subr.mxu0 0.0
    %319 = vmatpush1.msra.mxu0 0.0
    %320 = vmatprep.subr.mxu0 0.0
    %321 = vmatpush1.msra.mxu0 0.0
    %322 = vmatprep.subr.mxu0 0.0
    %323 = vmatpush1.msra.mxu0 0.0
    %324 = vmatprep.subr.mxu0 0.0
    %325 = vmatpush1.msra.mxu0 0.0
    %326 = vmatprep.subr.mxu0 0.0
    %327 = vmatpush1.msra.mxu0 0.0
    %328 = vmatprep.subr.mxu0 0.0
    %329 = vmatpush1.msra.mxu0 0.0
    %330 = vmatprep.subr.mxu0 0.0
    %331 = vmatpush1.msra.mxu0 0.0
    %332 = vmatprep.subr.mxu0 0.0
    %333 = vmatpush1.msra.mxu0 0.0
    %334 = vmatprep.subr.mxu0 0.0
    %335 = vmatpush1.msra.mxu0 0.0
    %336 = vmatprep.subr.mxu0 0.0
    %337 = vmatpush1.msra.mxu0 0.0
    %338 = vmatprep.subr.mxu0 0.0
    %339 = vmatpush1.msra.mxu0 0.0
    %340 = vmatprep.subr.mxu0 0.0
    %341 = vmatpush1.msra.mxu0 0.0
    %342 = vmatprep.mubr.f32.mxu0 0.0
    %343 = vmatmul.mubr.f32.gmra.mrb[0].mxu0 %v267
    %v344 = vpop.f32.mrb[0].mxu0
    %v345 = vadd.f32 0.0, %v344
    %v346 = vpop.f32.mrb[0].mxu0
    %347 = vmatprep.mubr.f32.mxu0 0.0
    %348 = vmatmul.mubr.f32.gmra.mrb[0].mxu0 %v270
    %v349 = vpop.f32.mrb[0].mxu0
    %v350 = vadd.f32 0.0, %v349
    %v351 = vpop.f32.mrb[0].mxu0
    %352 = vmatprep.mubr.f32.mxu0 0.0
    %353 = vmatmul.mubr.f32.gmra.mrb[0].mxu0 %v273
    %v354 = vpop.f32.mrb[0].mxu0
    %v355 = vadd.f32 0.0, %v354
    %v356 = vpop.f32.mrb[0].mxu0
    %357 = vmatprep.mubr.f32.mxu0 0.0
    %358 = vmatmul.mubr.f32.gmra.mrb[0].mxu0 %v276
    %v359 = vpop.f32.mrb[0].mxu0
    %v360 = vadd.f32 0.0, %v359
    %v361 = vpop.f32.mrb[0].mxu0
    %362 = vdwg.mxu0
    %v363 = vld [vmem:[%s4 + $0x40] sm:$0x1]
    %v364 = vlaneseq
    %v365 = vshrl.u32 %v364, 7
    %v366 = vsub.s32 0, %v365
    %v367 = vrot.slane %v363, %v366
    %368 = vmatprep.subr.mxu0 0.0
    %369 = vmatpush1.msra.mxu0 %v345
    %370 = vmatprep.subr.mxu0 0.0
    %371 = vmatpush1.msra.mxu0 %v350
    %372 = vmatprep.subr.mxu0 0.0
    %373 = vmatpush1.msra.mxu0 %v355
    %374 = vmatprep.subr.mxu0 0.0
    %375 = vmatpush1.msra.mxu0 %v360
    %376 = vmatprep.subr.mxu0 0.0
    %377 = vmatpush1.msra.mxu0 0.0
    %378 = vmatprep.subr.mxu0 0.0
    %379 = vmatpush1.msra.mxu0 0.0
    %380 = vmatprep.subr.mxu0 0.0
    %381 = vmatpush1.msra.mxu0 0.0
    %382 = vmatprep.subr.mxu0 0.0
    %383 = vmatpush1.msra.mxu0 0.0
    %384 = vmatprep.subr.mxu0 0.0
    %385 = vmatpush1.msra.mxu0 0.0
    %386 = vmatprep.subr.mxu0 0.0
    %387 = vmatpush1.msra.mxu0 0.0
    %388 = vmatprep.subr.mxu0 0.0
    %389 = vmatpush1.msra.mxu0 0.0
    %390 = vmatprep.subr.mxu0 0.0
    %391 = vmatpush1.msra.mxu0 0.0
    %392 = vmatprep.subr.mxu0 0.0
    %393 = vmatpush1.msra.mxu0 0.0
    %394 = vmatprep.subr.mxu0 0.0
    %395 = vmatpush1.msra.mxu0 0.0
    %396 = vmatprep.subr.mxu0 0.0
    %397 = vmatpush1.msra.mxu0 0.0
    %398 = vmatprep.subr.mxu0 0.0
    %399 = vmatpush1.msra.mxu0 0.0
    %400 = vmatprep.subr.mxu0 0.0
    %401 = vmatpush1.msra.mxu0 0.0
    %402 = vmatprep.subr.mxu0 0.0
    %403 = vmatpush1.msra.mxu0 0.0
    %404 = vmatprep.subr.mxu0 0.0
    %405 = vmatpush1.msra.mxu0 0.0
    %406 = vmatprep.subr.mxu0 0.0
    %407 = vmatpush1.msra.mxu0 0.0
    %408 = vmatprep.subr.mxu0 0.0
    %409 = vmatpush1.msra.mxu0 0.0
    %410 = vmatprep.subr.mxu0 0.0
    %411 = vmatpush1.msra.mxu0 0.0
    %412 = vmatprep.subr.mxu0 0.0
    %413 = vmatpush1.msra.mxu0 0.0
    %414 = vmatprep.subr.mxu0 0.0
    %415 = vmatpush1.msra.mxu0 0.0
    %416 = vmatprep.subr.mxu0 0.0
    %417 = vmatpush1.msra.mxu0 0.0
    %418 = vmatprep.subr.mxu0 0.0
    %419 = vmatpush1.msra.mxu0 0.0
    %420 = vmatprep.subr.mxu0 0.0
    %421 = vmatpush1.msra.mxu0 0.0
    %422 = vmatprep.subr.mxu0 0.0
    %423 = vmatpush1.msra.mxu0 0.0
    %424 = vmatprep.subr.mxu0 0.0
    %425 = vmatpush1.msra.mxu0 0.0
    %426 = vmatprep.subr.mxu0 0.0
    %427 = vmatpush1.msra.mxu0 0.0
    %428 = vmatprep.subr.mxu0 0.0
    %429 = vmatpush1.msra.mxu0 0.0
    %430 = vmatprep.subr.mxu0 0.0
    %431 = vmatpush1.msra.mxu0 0.0
    %432 = vmatprep.mubr.f32.mxu0 0.0
    %433 = vmatmul.mubr.f32.gmra.mrb[0].mxu0 %v157
    %v434 = vpop.f32.mrb[0].mxu0
    %v435 = vadd.f32 %v367, %v434
    %v436 = vpop.f32.mrb[0].mxu0
    %437 = vmatprep.mubr.f32.mxu0 0.0
    %438 = vmatmul.mubr.f32.gmra.mrb[0].mxu0 %v160
    %v439 = vpop.f32.mrb[0].mxu0
    %v440 = vadd.f32 %v367, %v439
    %v441 = vpop.f32.mrb[0].mxu0
    %442 = vmatprep.mubr.f32.mxu0 0.0
    %443 = vmatmul.mubr.f32.gmra.mrb[0].mxu0 %v163
    %v444 = vpop.f32.mrb[0].mxu0
    %v445 = vadd.f32 %v367, %v444
    %v446 = vpop.f32.mrb[0].mxu0
    %447 = vmatprep.mubr.f32.mxu0 0.0
    %448 = vmatmul.mubr.f32.gmra.mrb[0].mxu0 %v166
    %v449 = vpop.f32.mrb[0].mxu0
    %v450 = vadd.f32 %v367, %v449
    %v451 = vpop.f32.mrb[0].mxu0
    %452 = vdwg.mxu0
    %v453 = vmax.f32 %v435, 0.0
    %v454 = vmax.f32 %v440, 0.0
    %v455 = vmax.f32 %v445, 0.0
    %v456 = vmax.f32 %v450, 0.0
    %v457 = vld [vmem:[%s5] sm:$0xff]
    %v458 = vld [vmem:[%s5 + $0x8] sm:$0xff]
    %v459 = vld [vmem:[%s5 + $0x10] sm:$0xff]
    %v460 = vld [vmem:[%s5 + $0x18] sm:$0xff]
    %v462 = vsel %vm155, %v453, 0
    %v465 = vsel %vm155, %v454, 0
    %v468 = vsel %vm155, %v455, 0
    %v471 = vsel %vm155, %v456, 0
    %473 = vmatprep.subr.mxu0 0.0
    %474 = vmatpush1.msra.mxu0 %v457
    %475 = vmatprep.subr.mxu0 0.0
    %476 = vmatpush1.msra.mxu0 %v458
    %477 = vmatprep.subr.mxu0 0.0
    %478 = vmatpush1.msra.mxu0 %v459
    %479 = vmatprep.subr.mxu0 0.0
    %480 = vmatpush1.msra.mxu0 %v460
    %481 = vmatprep.subr.mxu0 0.0
    %482 = vmatpush1.msra.mxu0 0.0
    %483 = vmatprep.subr.mxu0 0.0
    %484 = vmatpush1.msra.mxu0 0.0
    %485 = vmatprep.subr.mxu0 0.0
    %486 = vmatpush1.msra.mxu0 0.0
    %487 = vmatprep.subr.mxu0 0.0
    %488 = vmatpush1.msra.mxu0 0.0
    %489 = vmatprep.subr.mxu0 0.0
    %490 = vmatpush1.msra.mxu0 0.0
    %491 = vmatprep.subr.mxu0 0.0
    %492 = vmatpush1.msra.mxu0 0.0
    %493 = vmatprep.subr.mxu0 0.0
    %494 = vmatpush1.msra.mxu0 0.0
    %495 = vmatprep.subr.mxu0 0.0
    %496 = vmatpush1.msra.mxu0 0.0
    %497 = vmatprep.subr.mxu0 0.0
    %498 = vmatpush1.msra.mxu0 0.0
    %499 = vmatprep.subr.mxu0 0.0
    %500 = vmatpush1.msra.mxu0 0.0
    %501 = vmatprep.subr.mxu0 0.0
    %502 = vmatpush1.msra.mxu0 0.0
    %503 = vmatprep.subr.mxu0 0.0
    %504 = vmatpush1.msra.mxu0 0.0
    %505 = vmatprep.subr.mxu0 0.0
    %506 = vmatpush1.msra.mxu0 0.0
    %507 = vmatprep.subr.mxu0 0.0
    %508 = vmatpush1.msra.mxu0 0.0
    %509 = vmatprep.subr.mxu0 0.0
    %510 = vmatpush1.msra.mxu0 0.0
    %511 = vmatprep.subr.mxu0 0.0
    %512 = vmatpush1.msra.mxu0 0.0
    %513 = vmatprep.subr.mxu0 0.0
    %514 = vmatpush1.msra.mxu0 0.0
    %515 = vmatprep.subr.mxu0 0.0
    %516 = vmatpush1.msra.mxu0 0.0
    %517 = vmatprep.subr.mxu0 0.0
    %518 = vmatpush1.msra.mxu0 0.0
    %519 = vmatprep.subr.mxu0 0.0
    %520 = vmatpush1.msra.mxu0 0.0
    %521 = vmatprep.subr.mxu0 0.0
    %522 = vmatpush1.msra.mxu0 0.0
    %523 = vmatprep.subr.mxu0 0.0
    %524 = vmatpush1.msra.mxu0 0.0
    %525 = vmatprep.subr.mxu0 0.0
    %526 = vmatpush1.msra.mxu0 0.0
    %527 = vmatprep.subr.mxu0 0.0
    %528 = vmatpush1.msra.mxu0 0.0
    %529 = vmatprep.subr.mxu0 0.0
    %530 = vmatpush1.msra.mxu0 0.0
    %531 = vmatprep.subr.mxu0 0.0
    %532 = vmatpush1.msra.mxu0 0.0
    %533 = vmatprep.subr.mxu0 0.0
    %534 = vmatpush1.msra.mxu0 0.0
    %535 = vmatprep.subr.mxu0 0.0
    %536 = vmatpush1.msra.mxu0 0.0
    %537 = vmatprep.mubr.f32.mxu0 0.0
    %538 = vmatmul.mubr.f32.gmra.mrb[0].mxu0 %v462
    %v539 = vpop.f32.mrb[0].mxu0
    %v540 = vadd.f32 0.0, %v539
    %v541 = vpop.f32.mrb[0].mxu0
    %542 = vmatprep.mubr.f32.mxu0 0.0
    %543 = vmatmul.mubr.f32.gmra.mrb[0].mxu0 %v465
    %v544 = vpop.f32.mrb[0].mxu0
    %v545 = vadd.f32 0.0, %v544
    %v546 = vpop.f32.mrb[0].mxu0
    %547 = vmatprep.mubr.f32.mxu0 0.0
    %548 = vmatmul.mubr.f32.gmra.mrb[0].mxu0 %v468
    %v549 = vpop.f32.mrb[0].mxu0
    %v550 = vadd.f32 0.0, %v549
    %v551 = vpop.f32.mrb[0].mxu0
    %552 = vmatprep.mubr.f32.mxu0 0.0
    %553 = vmatmul.mubr.f32.gmra.mrb[0].mxu0 %v471
    %v554 = vpop.f32.mrb[0].mxu0
    %v555 = vadd.f32 0.0, %v554
    %v556 = vpop.f32.mrb[0].mxu0
    %557 = vdwg.mxu0
    %v558 = vld [vmem:[%s7 + $0x140] sm:$0x1]
    %v559 = vlaneseq
    %v560 = vshrl.u32 %v559, 7
    %v561 = vsub.s32 0, %v560
    %v562 = vrot.slane %v558, %v561
    %563 = vmatprep.subr.mxu0 0.0
    %564 = vmatpush1.msra.mxu0 %v540
    %565 = vmatprep.subr.mxu0 0.0
    %566 = vmatpush1.msra.mxu0 %v545
    %567 = vmatprep.subr.mxu0 0.0
    %568 = vmatpush1.msra.mxu0 %v550
    %569 = vmatprep.subr.mxu0 0.0
    %570 = vmatpush1.msra.mxu0 %v555
    %571 = vmatprep.subr.mxu0 0.0
    %572 = vmatpush1.msra.mxu0 0.0
    %573 = vmatprep.subr.mxu0 0.0
    %574 = vmatpush1.msra.mxu0 0.0
    %575 = vmatprep.subr.mxu0 0.0
    %576 = vmatpush1.msra.mxu0 0.0
    %577 = vmatprep.subr.mxu0 0.0
    %578 = vmatpush1.msra.mxu0 0.0
    %579 = vmatprep.subr.mxu0 0.0
    %580 = vmatpush1.msra.mxu0 0.0
    %581 = vmatprep.subr.mxu0 0.0
    %582 = vmatpush1.msra.mxu0 0.0
    %583 = vmatprep.subr.mxu0 0.0
    %584 = vmatpush1.msra.mxu0 0.0
    %585 = vmatprep.subr.mxu0 0.0
    %586 = vmatpush1.msra.mxu0 0.0
    %587 = vmatprep.subr.mxu0 0.0
    %588 = vmatpush1.msra.mxu0 0.0
    %589 = vmatprep.subr.mxu0 0.0
    %590 = vmatpush1.msra.mxu0 0.0
    %591 = vmatprep.subr.mxu0 0.0
    %592 = vmatpush1.msra.mxu0 0.0
    %593 = vmatprep.subr.mxu0 0.0
    %594 = vmatpush1.msra.mxu0 0.0
    %595 = vmatprep.subr.mxu0 0.0
    %596 = vmatpush1.msra.mxu0 0.0
    %597 = vmatprep.subr.mxu0 0.0
    %598 = vmatpush1.msra.mxu0 0.0
    %599 = vmatprep.subr.mxu0 0.0
    %600 = vmatpush1.msra.mxu0 0.0
    %601 = vmatprep.subr.mxu0 0.0
    %602 = vmatpush1.msra.mxu0 0.0
    %603 = vmatprep.subr.mxu0 0.0
    %604 = vmatpush1.msra.mxu0 0.0
    %605 = vmatprep.subr.mxu0 0.0
    %606 = vmatpush1.msra.mxu0 0.0
    %607 = vmatprep.subr.mxu0 0.0
    %608 = vmatpush1.msra.mxu0 0.0
    %609 = vmatprep.subr.mxu0 0.0
    %610 = vmatpush1.msra.mxu0 0.0
    %611 = vmatprep.subr.mxu0 0.0
    %612 = vmatpush1.msra.mxu0 0.0
    %613 = vmatprep.subr.mxu0 0.0
    %614 = vmatpush1.msra.mxu0 0.0
    %615 = vmatprep.subr.mxu0 0.0
    %616 = vmatpush1.msra.mxu0 0.0
    %617 = vmatprep.subr.mxu0 0.0
    %618 = vmatpush1.msra.mxu0 0.0
    %619 = vmatprep.subr.mxu0 0.0
    %620 = vmatpush1.msra.mxu0 0.0
    %621 = vmatprep.subr.mxu0 0.0
    %622 = vmatpush1.msra.mxu0 0.0
    %623 = vmatprep.subr.mxu0 0.0
    %624 = vmatpush1.msra.mxu0 0.0
    %625 = vmatprep.subr.mxu0 0.0
    %626 = vmatpush1.msra.mxu0 0.0
    %627 = vmatprep.mubr.f32.mxu0 0.0
    %628 = vmatmul.mubr.f32.gmra.mrb[0].mxu0 %v157
    %v629 = vpop.f32.mrb[0].mxu0
    %v630 = vadd.f32 %v562, %v629
    %v631 = vpop.f32.mrb[0].mxu0
    %632 = vmatprep.mubr.f32.mxu0 0.0
    %633 = vmatmul.mubr.f32.gmra.mrb[0].mxu0 %v160
    %v634 = vpop.f32.mrb[0].mxu0
    %v635 = vadd.f32 %v562, %v634
    %v636 = vpop.f32.mrb[0].mxu0
    %637 = vmatprep.mubr.f32.mxu0 0.0
    %638 = vmatmul.mubr.f32.gmra.mrb[0].mxu0 %v163
    %v639 = vpop.f32.mrb[0].mxu0
    %v640 = vadd.f32 %v562, %v639
    %v641 = vpop.f32.mrb[0].mxu0
    %642 = vmatprep.mubr.f32.mxu0 0.0
    %643 = vmatmul.mubr.f32.gmra.mrb[0].mxu0 %v166
    %v644 = vpop.f32.mrb[0].mxu0
    %v645 = vadd.f32 %v562, %v644
    %v646 = vpop.f32.mrb[0].mxu0
    %647 = vdwg.mxu0
    %v648 = vld [vmem:[%s7] sm:$0xff]
    %v649 = vld [vmem:[%s7 + $0x8] sm:$0xff]
    %v650 = vlaneseq
    %v651 = vshrl.u32 %v650, 7
    %v652 = vadd.s32 %v651, 8
    %s653 = sld [smem:[#allocation2]]
    %v654 = vstv %s653
    %vm655 = vcmp.lt.s32.totalorder %v651, %v654
    %vm656 = vcmp.lt.s32.totalorder %v652, %v654
    %v657 = vsel %vm655, 1, 0
    %v658 = vsel %vm656, 1, 0
    %v659 = vcvt.s32.f32 %v657
    %v660 = vcvt.s32.f32 %v658
    %v661 = vmul.f32 %v630, %v659
    %v662 = vmul.f32 %v635, %v660
    %vm663 = vcmask 130048
    %v665 = vsel %vm663, %v661, 0
    %v668 = vsel %vm663, %v662, 0
    %670 = vmatprep.subr.mxu0 0.0
    %671 = vmatpush1.msra.mxu0 %v648
    %672 = vmatprep.subr.mxu0 0.0
    %673 = vmatpush1.msra.mxu0 %v649
    %674 = vmatprep.subr.mxu0 0.0
    %675 = vmatpush1.msra.mxu0 0.0
    %676 = vmatprep.subr.mxu0 0.0
    %677 = vmatpush1.msra.mxu0 0.0
    %678 = vmatprep.subr.mxu0 0.0
    %679 = vmatpush1.msra.mxu0 0.0
    %680 = vmatprep.subr.mxu0 0.0
    %681 = vmatpush1.msra.mxu0 0.0
    %682 = vmatprep.subr.mxu0 0.0
    %683 = vmatpush1.msra.mxu0 0.0
    %684 = vmatprep.subr.mxu0 0.0
    %685 = vmatpush1.msra.mxu0 0.0
    %686 = vmatprep.subr.mxu0 0.0
    %687 = vmatpush1.msra.mxu0 0.0
    %688 = vmatprep.subr.mxu0 0.0
    %689 = vmatpush1.msra.mxu0 0.0
    %690 = vmatprep.subr.mxu0 0.0
    %691 = vmatpush1.msra.mxu0 0.0
    %692 = vmatprep.subr.mxu0 0.0
    %693 = vmatpush1.msra.mxu0 0.0
    %694 = vmatprep.subr.mxu0 0.0
    %695 = vmatpush1.msra.mxu0 0.0
    %696 = vmatprep.subr.mxu0 0.0
    %697 = vmatpush1.msra.mxu0 0.0
    %698 = vmatprep.subr.mxu0 0.0
    %699 = vmatpush1.msra.mxu0 0.0
    %700 = vmatprep.subr.mxu0 0.0
    %701 = vmatpush1.msra.mxu0 0.0
    %702 = vmatprep.subr.mxu0 0.0
    %703 = vmatpush1.msra.mxu0 0.0
    %704 = vmatprep.subr.mxu0 0.0
    %705 = vmatpush1.msra.mxu0 0.0
    %706 = vmatprep.subr.mxu0 0.0
    %707 = vmatpush1.msra.mxu0 0.0
    %708 = vmatprep.subr.mxu0 0.0
    %709 = vmatpush1.msra.mxu0 0.0
    %710 = vmatprep.subr.mxu0 0.0
    %711 = vmatpush1.msra.mxu0 0.0
    %712 = vmatprep.subr.mxu0 0.0
    %713 = vmatpush1.msra.mxu0 0.0
    %714 = vmatprep.subr.mxu0 0.0
    %715 = vmatpush1.msra.mxu0 0.0
    %716 = vmatprep.subr.mxu0 0.0
    %717 = vmatpush1.msra.mxu0 0.0
    %718 = vmatprep.subr.mxu0 0.0
    %719 = vmatpush1.msra.mxu0 0.0
    %720 = vmatprep.subr.mxu0 0.0
    %721 = vmatpush1.msra.mxu0 0.0
    %722 = vmatprep.subr.mxu0 0.0
    %723 = vmatpush1.msra.mxu0 0.0
    %724 = vmatprep.subr.mxu0 0.0
    %725 = vmatpush1.msra.mxu0 0.0
    %726 = vmatprep.subr.mxu0 0.0
    %727 = vmatpush1.msra.mxu0 0.0
    %728 = vmatprep.subr.mxu0 0.0
    %729 = vmatpush1.msra.mxu0 0.0
    %730 = vmatprep.subr.mxu0 0.0
    %731 = vmatpush1.msra.mxu0 0.0
    %732 = vmatprep.subr.mxu0 0.0
    %733 = vmatpush1.msra.mxu0 0.0
    %734 = vmatprep.mubr.f32.mxu0 0.0
    %735 = vmatmul.mubr.f32.gmra.mrb[0].mxu0 %v665
    %v736 = vpop.f32.mrb[0].mxu0
    %v737 = vadd.f32 0.0, %v736
    %v738 = vpop.f32.mrb[0].mxu0
    %739 = vmatprep.mubr.f32.mxu0 0.0
    %740 = vmatmul.mubr.f32.gmra.mrb[0].mxu0 %v668
    %v741 = vpop.f32.mrb[0].mxu0
    %v742 = vadd.f32 0.0, %v741
    %v743 = vpop.f32.mrb[0].mxu0
    %744 = vdwg.mxu0
    %v745 = vsel %vm663, %v737, 0.0
    %v746 = vsel %vm663, %v742, 0.0
    %v747 = vadd.f32 %v745, %v746
    %v748 = vrot.slane %v747, 4
    %v749 = vadd.f32 %v747, %v748
    %v750 = vrot.slane %v749, 2
    %v751 = vadd.f32 %v749, %v750
    %v752 = vrot.slane %v751, 1
    %v753 = vadd.f32 %v751, %v752
    %s754 = scvt.s32.f32 %s653
    %v755 = vstv %s754
    %v756 = vrcp.pop %v755
    %v757 = vmul.f32 %v753, %v756
    %v758 = vtanh.pop %v757
    %v759 = vmul.f32 %v630, %v758
    %v760 = vmul.f32 %v635, %v758
    %v761 = vsel %vm663, %v759, 0.0
    %762 = vadd.xlane.f32.xlu0 %v761
    %v763 = vpop.xlane.xlu0 %762
    %v764 = vsel %vm663, %v760, 0.0
    %765 = vadd.xlane.f32.xlu0 %v764
    %v766 = vpop.xlane.xlu0 %765
    %v767 = vsub.f32 0.0, %v763
    %v768 = vsub.f32 0.0, %v766
    %v769 = vmul.f32 %v767, 1.442695
    %v770 = vpow.pop %v769
    %v771 = vmul.f32 %v768, 1.442695
    %v772 = vpow.pop %v771
    %v773 = vadd.f32 %v770, 1.0
    %v774 = vadd.f32 %v772, 1.0
    %v775 = vrcp.pop %v773
    %v776 = vrcp.pop %v774
    %v777 = vmul.f32 %v661, %v775
    %v778 = vmul.f32 %v662, %v776
    %v779 = vsel %vm663, %v777, 0.0
    %v780 = vsel %vm663, %v778, 0.0
    %v781 = vadd.f32 %v779, %v780
    %v782 = vrot.slane %v781, 4
    %v783 = vadd.f32 %v781, %v782
    %v784 = vrot.slane %v783, 2
    %v785 = vadd.f32 %v783, %v784
    %v786 = vrot.slane %v785, 1
    %v787 = vadd.f32 %v785, %v786
    %s788 = sld [smem:[#allocation2 + $0x1]]
    %v789 = vstv %s788
    %vm790 = vcmp.lt.s32.totalorder %v651, %v789
    %vm791 = vcmp.lt.s32.totalorder %v652, %v789
    %v792 = vsel %vm790, 1, 0
    %v793 = vsel %vm791, 1, 0
    %v794 = vcvt.s32.f32 %v792
    %v795 = vcvt.s32.f32 %v793
    %v796 = vmul.f32 %v640, %v794
    %v797 = vmul.f32 %v645, %v795
    %v799 = vsel %vm663, %v796, 0
    %v802 = vsel %vm663, %v797, 0
    %804 = vmatprep.subr.mxu0 0.0
    %805 = vmatpush1.msra.mxu0 %v648
    %806 = vmatprep.subr.mxu0 0.0
    %807 = vmatpush1.msra.mxu0 %v649
    %808 = vmatprep.subr.mxu0 0.0
    %809 = vmatpush1.msra.mxu0 0.0
    %810 = vmatprep.subr.mxu0 0.0
    %811 = vmatpush1.msra.mxu0 0.0
    %812 = vmatprep.subr.mxu0 0.0
    %813 = vmatpush1.msra.mxu0 0.0
    %814 = vmatprep.subr.mxu0 0.0
    %815 = vmatpush1.msra.mxu0 0.0
    %816 = vmatprep.subr.mxu0 0.0
    %817 = vmatpush1.msra.mxu0 0.0
    %818 = vmatprep.subr.mxu0 0.0
    %819 = vmatpush1.msra.mxu0 0.0
    %820 = vmatprep.subr.mxu0 0.0
    %821 = vmatpush1.msra.mxu0 0.0
    %822 = vmatprep.subr.mxu0 0.0
    %823 = vmatpush1.msra.mxu0 0.0
    %824 = vmatprep.subr.mxu0 0.0
    %825 = vmatpush1.msra.mxu0 0.0
    %826 = vmatprep.subr.mxu0 0.0
    %827 = vmatpush1.msra.mxu0 0.0
    %828 = vmatprep.subr.mxu0 0.0
    %829 = vmatpush1.msra.mxu0 0.0
    %830 = vmatprep.subr.mxu0 0.0
    %831 = vmatpush1.msra.mxu0 0.0
    %832 = vmatprep.subr.mxu0 0.0
    %833 = vmatpush1.msra.mxu0 0.0
    %834 = vmatprep.subr.mxu0 0.0
    %835 = vmatpush1.msra.mxu0 0.0
    %836 = vmatprep.subr.mxu0 0.0
    %837 = vmatpush1.msra.mxu0 0.0
    %838 = vmatprep.subr.mxu0 0.0
    %839 = vmatpush1.msra.mxu0 0.0
    %840 = vmatprep.subr.mxu0 0.0
    %841 = vmatpush1.msra.mxu0 0.0
    %842 = vmatprep.subr.mxu0 0.0
    %843 = vmatpush1.msra.mxu0 0.0
    %844 = vmatprep.subr.mxu0 0.0
    %845 = vmatpush1.msra.mxu0 0.0
    %846 = vmatprep.subr.mxu0 0.0
    %847 = vmatpush1.msra.mxu0 0.0
    %848 = vmatprep.subr.mxu0 0.0
    %849 = vmatpush1.msra.mxu0 0.0
    %850 = vmatprep.subr.mxu0 0.0
    %851 = vmatpush1.msra.mxu0 0.0
    %852 = vmatprep.subr.mxu0 0.0
    %853 = vmatpush1.msra.mxu0 0.0
    %854 = vmatprep.subr.mxu0 0.0
    %855 = vmatpush1.msra.mxu0 0.0
    %856 = vmatprep.subr.mxu0 0.0
    %857 = vmatpush1.msra.mxu0 0.0
    %858 = vmatprep.subr.mxu0 0.0
    %859 = vmatpush1.msra.mxu0 0.0
    %860 = vmatprep.subr.mxu0 0.0
    %861 = vmatpush1.msra.mxu0 0.0
    %862 = vmatprep.subr.mxu0 0.0
    %863 = vmatpush1.msra.mxu0 0.0
    %864 = vmatprep.subr.mxu0 0.0
    %865 = vmatpush1.msra.mxu0 0.0
    %866 = vmatprep.subr.mxu0 0.0
    %867 = vmatpush1.msra.mxu0 0.0
    %868 = vmatprep.mubr.f32.mxu0 0.0
    %869 = vmatmul.mubr.f32.gmra.mrb[0].mxu0 %v799
    %v870 = vpop.f32.mrb[0].mxu0
    %v871 = vadd.f32 0.0, %v870
    %v872 = vpop.f32.mrb[0].mxu0
    %873 = vmatprep.mubr.f32.mxu0 0.0
    %874 = vmatmul.mubr.f32.gmra.mrb[0].mxu0 %v802
    %v875 = vpop.f32.mrb[0].mxu0
    %v876 = vadd.f32 0.0, %v875
    %v877 = vpop.f32.mrb[0].mxu0
    %878 = vdwg.mxu0
    %v879 = vsel %vm663, %v871, 0.0
    %v880 = vsel %vm663, %v876, 0.0
    %v881 = vadd.f32 %v879, %v880
    %v882 = vrot.slane %v881, 4
    %v883 = vadd.f32 %v881, %v882
    %v884 = vrot.slane %v883, 2
    %v885 = vadd.f32 %v883, %v884
    %v886 = vrot.slane %v885, 1
    %v887 = vadd.f32 %v885, %v886
    %s888 = scvt.s32.f32 %s788
    %v889 = vstv %s888
    %v890 = vrcp.pop %v889
    %v891 = vmul.f32 %v887, %v890
    %v892 = vtanh.pop %v891
    %v893 = vmul.f32 %v640, %v892
    %v894 = vmul.f32 %v645, %v892
    %v895 = vsel %vm663, %v893, 0.0
    %896 = vadd.xlane.f32.xlu0 %v895
    %v897 = vpop.xlane.xlu0 %896
    %v898 = vsel %vm663, %v894, 0.0
    %899 = vadd.xlane.f32.xlu0 %v898
    %v900 = vpop.xlane.xlu0 %899
    %v901 = vsub.f32 0.0, %v897
    %v902 = vsub.f32 0.0, %v900
    %v903 = vmul.f32 %v901, 1.442695
    %v904 = vpow.pop %v903
    %v905 = vmul.f32 %v902, 1.442695
    %v906 = vpow.pop %v905
    %v907 = vadd.f32 %v904, 1.0
    %v908 = vadd.f32 %v906, 1.0
    %v909 = vrcp.pop %v907
    %v910 = vrcp.pop %v908
    %v911 = vmul.f32 %v796, %v909
    %v912 = vmul.f32 %v797, %v910
    %v913 = vsel %vm663, %v911, 0.0
    %v914 = vsel %vm663, %v912, 0.0
    %v915 = vadd.f32 %v913, %v914
    %v916 = vrot.slane %v915, 4
    %v917 = vadd.f32 %v915, %v916
    %v918 = vrot.slane %v917, 2
    %v919 = vadd.f32 %v917, %v918
    %v920 = vrot.slane %v919, 1
    %v921 = vadd.f32 %v919, %v920
    %v922 = vld [vmem:[%s6] sm:$0xff]
    %v923 = vld [vmem:[%s6 + $0x8] sm:$0xff]
    %v924 = vld [vmem:[%s6 + $0x10] sm:$0xff]
    %v925 = vld [vmem:[%s6 + $0x18] sm:$0xff]
    %v926 = vld [vmem:[%s6 + $0x20] sm:$0xff]
    %v927 = vld [vmem:[%s6 + $0x28] sm:$0xff]
    %v928 = vld [vmem:[%s6 + $0x30] sm:$0xff]
    %v929 = vld [vmem:[%s6 + $0x38] sm:$0xff]
    %v931 = vsel %vm663, %v787, 0
    %933 = vmatprep.subr.mxu0 %v923
    %934 = vmatpush1.msra.mxu0 %v922
    %935 = vmatprep.subr.mxu0 %v925
    %936 = vmatpush1.msra.mxu0 %v924
    %937 = vmatprep.subr.mxu0 0.0
    %938 = vmatpush1.msra.mxu0 0.0
    %939 = vmatprep.subr.mxu0 0.0
    %940 = vmatpush1.msra.mxu0 0.0
    %941 = vmatprep.subr.mxu0 0.0
    %942 = vmatpush1.msra.mxu0 0.0
    %943 = vmatprep.subr.mxu0 0.0
    %944 = vmatpush1.msra.mxu0 0.0
    %945 = vmatprep.subr.mxu0 0.0
    %946 = vmatpush1.msra.mxu0 0.0
    %947 = vmatprep.subr.mxu0 0.0
    %948 = vmatpush1.msra.mxu0 0.0
    %949 = vmatprep.subr.mxu0 0.0
    %950 = vmatpush1.msra.mxu0 0.0
    %951 = vmatprep.subr.mxu0 0.0
    %952 = vmatpush1.msra.mxu0 0.0
    %953 = vmatprep.subr.mxu0 0.0
    %954 = vmatpush1.msra.mxu0 0.0
    %955 = vmatprep.subr.mxu0 0.0
    %956 = vmatpush1.msra.mxu0 0.0
    %957 = vmatprep.subr.mxu0 0.0
    %958 = vmatpush1.msra.mxu0 0.0
    %959 = vmatprep.subr.mxu0 0.0
    %960 = vmatpush1.msra.mxu0 0.0
    %961 = vmatprep.subr.mxu0 0.0
    %962 = vmatpush1.msra.mxu0 0.0
    %963 = vmatprep.subr.mxu0 0.0
    %964 = vmatpush1.msra.mxu0 0.0
    %965 = vmatprep.subr.mxu0 0.0
    %966 = vmatpush1.msra.mxu0 0.0
    %967 = vmatprep.subr.mxu0 0.0
    %968 = vmatpush1.msra.mxu0 0.0
    %969 = vmatprep.subr.mxu0 0.0
    %970 = vmatpush1.msra.mxu0 0.0
    %971 = vmatprep.subr.mxu0 0.0
    %972 = vmatpush1.msra.mxu0 0.0
    %973 = vmatprep.subr.mxu0 0.0
    %974 = vmatpush1.msra.mxu0 0.0
    %975 = vmatprep.subr.mxu0 0.0
    %976 = vmatpush1.msra.mxu0 0.0
    %977 = vmatprep.subr.mxu0 0.0
    %978 = vmatpush1.msra.mxu0 0.0
    %979 = vmatprep.subr.mxu0 0.0
    %980 = vmatpush1.msra.mxu0 0.0
    %981 = vmatprep.subr.mxu0 0.0
    %982 = vmatpush1.msra.mxu0 0.0
    %983 = vmatprep.subr.mxu0 0.0
    %984 = vmatpush1.msra.mxu0 0.0
    %985 = vmatprep.subr.mxu0 0.0
    %986 = vmatpush1.msra.mxu0 0.0
    %987 = vmatprep.subr.mxu0 0.0
    %988 = vmatpush1.msra.mxu0 0.0
    %989 = vmatprep.subr.mxu0 0.0
    %990 = vmatpush1.msra.mxu0 0.0
    %991 = vmatprep.subr.mxu0 0.0
    %992 = vmatpush1.msra.mxu0 0.0
    %993 = vmatprep.subr.mxu0 0.0
    %994 = vmatpush1.msra.mxu0 0.0
    %995 = vmatprep.subr.mxu0 0.0
    %996 = vmatpush1.msra.mxu0 0.0
    %997 = vmatprep.mubr.f32.mxu0 0.0
    %998 = vmatmul.mubr.f32.gmra.mrb[0].mxu0 %v931
    %v999 = vpop.f32.mrb[0].mxu0
    %v1000 = vadd.f32 0.0, %v999
    %v1001 = vpop.f32.mrb[0].mxu0
    %v1002 = vadd.f32 0.0, %v1001
    %1003 = vdwg.mxu0
    %v1005 = vsel %vm663, %v921, 0
    %1007 = vmatprep.subr.mxu0 %v927
    %1008 = vmatpush1.msra.mxu0 %v926
    %1009 = vmatprep.subr.mxu0 %v929
    %1010 = vmatpush1.msra.mxu0 %v928
    %1011 = vmatprep.subr.mxu0 0.0
    %1012 = vmatpush1.msra.mxu0 0.0
    %1013 = vmatprep.subr.mxu0 0.0
    %1014 = vmatpush1.msra.mxu0 0.0
    %1015 = vmatprep.subr.mxu0 0.0
    %1016 = vmatpush1.msra.mxu0 0.0
    %1017 = vmatprep.subr.mxu0 0.0
    %1018 = vmatpush1.msra.mxu0 0.0
    %1019 = vmatprep.subr.mxu0 0.0
    %1020 = vmatpush1.msra.mxu0 0.0
    %1021 = vmatprep.subr.mxu0 0.0
    %1022 = vmatpush1.msra.mxu0 0.0
    %1023 = vmatprep.subr.mxu0 0.0
    %1024 = vmatpush1.msra.mxu0 0.0
    %1025 = vmatprep.subr.mxu0 0.0
    %1026 = vmatpush1.msra.mxu0 0.0
    %1027 = vmatprep.subr.mxu0 0.0
    %1028 = vmatpush1.msra.mxu0 0.0
    %1029 = vmatprep.subr.mxu0 0.0
    %1030 = vmatpush1.msra.mxu0 0.0
    %1031 = vmatprep.subr.mxu0 0.0
    %1032 = vmatpush1.msra.mxu0 0.0
    %1033 = vmatprep.subr.mxu0 0.0
    %1034 = vmatpush1.msra.mxu0 0.0
    %1035 = vmatprep.subr.mxu0 0.0
    %1036 = vmatpush1.msra.mxu0 0.0
    %1037 = vmatprep.subr.mxu0 0.0
    %1038 = vmatpush1.msra.mxu0 0.0
    %1039 = vmatprep.subr.mxu0 0.0
    %1040 = vmatpush1.msra.mxu0 0.0
    %1041 = vmatprep.subr.mxu0 0.0
    %1042 = vmatpush1.msra.mxu0 0.0
    %1043 = vmatprep.subr.mxu0 0.0
    %1044 = vmatpush1.msra.mxu0 0.0
    %1045 = vmatprep.subr.mxu0 0.0
    %1046 = vmatpush1.msra.mxu0 0.0
    %1047 = vmatprep.subr.mxu0 0.0
    %1048 = vmatpush1.msra.mxu0 0.0
    %1049 = vmatprep.subr.mxu0 0.0
    %1050 = vmatpush1.msra.mxu0 0.0
    %1051 = vmatprep.subr.mxu0 0.0
    %1052 = vmatpush1.msra.mxu0 0.0
    %1053 = vmatprep.subr.mxu0 0.0
    %1054 = vmatpush1.msra.mxu0 0.0
    %1055 = vmatprep.subr.mxu0 0.0
    %1056 = vmatpush1.msra.mxu0 0.0
    %1057 = vmatprep.subr.mxu0 0.0
    %1058 = vmatpush1.msra.mxu0 0.0
    %1059 = vmatprep.subr.mxu0 0.0
    %1060 = vmatpush1.msra.mxu0 0.0
    %1061 = vmatprep.subr.mxu0 0.0
    %1062 = vmatpush1.msra.mxu0 0.0
    %1063 = vmatprep.subr.mxu0 0.0
    %1064 = vmatpush1.msra.mxu0 0.0
    %1065 = vmatprep.subr.mxu0 0.0
    %1066 = vmatpush1.msra.mxu0 0.0
    %1067 = vmatprep.subr.mxu0 0.0
    %1068 = vmatpush1.msra.mxu0 0.0
    %1069 = vmatprep.subr.mxu0 0.0
    %1070 = vmatpush1.msra.mxu0 0.0
    %1071 = vmatprep.mubr.f32.mxu0 0.0
    %1072 = vmatmul.mubr.f32.gmra.mrb[0].mxu0 %v1005
    %v1073 = vpop.f32.mrb[0].mxu0
    %v1074 = vadd.f32 0.0, %v1073
    %v1075 = vpop.f32.mrb[0].mxu0
    %v1076 = vadd.f32 0.0, %v1075
    %1077 = vdwg.mxu0
    %v1078 = vmul.f32 %v1000, %v1074
    %v1079 = vmul.f32 %v1002, %v1076
    %v1080 = vld [vmem:[%s7 + $0x40] sm:$0xff]
    %v1081 = vld [vmem:[%s7 + $0x48] sm:$0xff]
    %v1082 = vld [vmem:[%s7 + $0x50] sm:$0xff]
    %v1083 = vld [vmem:[%s7 + $0x58] sm:$0xff]
    %v1084 = vld [vmem:[%s7 + $0x60] sm:$0xff]
    %v1085 = vld [vmem:[%s7 + $0x68] sm:$0xff]
    %v1086 = vld [vmem:[%s7 + $0x70] sm:$0xff]
    %v1087 = vld [vmem:[%s7 + $0x78] sm:$0xff]
    %v1088 = vld [vmem:[%s7 + $0x80] sm:$0xff]
    %v1089 = vld [vmem:[%s7 + $0x88] sm:$0xff]
    %v1090 = vld [vmem:[%s7 + $0x90] sm:$0xff]
    %v1091 = vld [vmem:[%s7 + $0x98] sm:$0xff]
    %v1092 = vld [vmem:[%s7 + $0xa0] sm:$0xff]
    %v1093 = vld [vmem:[%s7 + $0xa8] sm:$0xff]
    %v1094 = vld [vmem:[%s7 + $0xb0] sm:$0xff]
    %v1095 = vld [vmem:[%s7 + $0xb8] sm:$0xff]
    %v1096 = vld [vmem:[%s7 + $0xc0] sm:$0xff]
    %v1097 = vld [vmem:[%s7 + $0xc8] sm:$0xff]
    %v1098 = vld [vmem:[%s7 + $0xd0] sm:$0xff]
    %v1099 = vld [vmem:[%s7 + $0xd8] sm:$0xff]
    %v1100 = vld [vmem:[%s7 + $0xe0] sm:$0xff]
    %v1101 = vld [vmem:[%s7 + $0xe8] sm:$0xff]
    %v1102 = vld [vmem:[%s7 + $0xf0] sm:$0xff]
    %v1103 = vld [vmem:[%s7 + $0xf8] sm:$0xff]
    %v1104 = vld [vmem:[%s7 + $0x100] sm:$0xff]
    %v1105 = vld [vmem:[%s7 + $0x108] sm:$0xff]
    %v1106 = vld [vmem:[%s7 + $0x110] sm:$0xff]
    %v1107 = vld [vmem:[%s7 + $0x118] sm:$0xff]
    %v1108 = vld [vmem:[%s7 + $0x120] sm:$0xff]
    %v1109 = vld [vmem:[%s7 + $0x128] sm:$0xff]
    %v1110 = vld [vmem:[%s7 + $0x130] sm:$0xff]
    %v1111 = vld [vmem:[%s7 + $0x138] sm:$0xff]
    %v1112 = vld [vmem:[%s7 + $0x10] sm:$0xff]
    %v1113 = vld [vmem:[%s7 + $0x18] sm:$0xff]
    %v1114 = vld [vmem:[%s7 + $0x20] sm:$0xff]
    %v1115 = vld [vmem:[%s7 + $0x28] sm:$0xff]
    %1116 = vmatprep.subr.mxu0 0.0
    %1117 = vmatpush1.msra.mxu0 %v1114
    %1118 = vmatprep.subr.mxu0 0.0
    %1119 = vmatpush1.msra.mxu0 %v1115
    %1120 = vmatprep.subr.mxu0 0.0
    %1121 = vmatpush1.msra.mxu0 0.0
    %1122 = vmatprep.subr.mxu0 0.0
    %1123 = vmatpush1.msra.mxu0 0.0
    %1124 = vmatprep.subr.mxu0 0.0
    %1125 = vmatpush1.msra.mxu0 0.0
    %1126 = vmatprep.subr.mxu0 0.0
    %1127 = vmatpush1.msra.mxu0 0.0
    %1128 = vmatprep.subr.mxu0 0.0
    %1129 = vmatpush1.msra.mxu0 0.0
    %1130 = vmatprep.subr.mxu0 0.0
    %1131 = vmatpush1.msra.mxu0 0.0
    %1132 = vmatprep.subr.mxu0 0.0
    %1133 = vmatpush1.msra.mxu0 0.0
    %1134 = vmatprep.subr.mxu0 0.0
    %1135 = vmatpush1.msra.mxu0 0.0
    %1136 = vmatprep.subr.mxu0 0.0
    %1137 = vmatpush1.msra.mxu0 0.0
    %1138 = vmatprep.subr.mxu0 0.0
    %1139 = vmatpush1.msra.mxu0 0.0
    %1140 = vmatprep.subr.mxu0 0.0
    %1141 = vmatpush1.msra.mxu0 0.0
    %1142 = vmatprep.subr.mxu0 0.0
    %1143 = vmatpush1.msra.mxu0 0.0
    %1144 = vmatprep.subr.mxu0 0.0
    %1145 = vmatpush1.msra.mxu0 0.0
    %1146 = vmatprep.subr.mxu0 0.0
    %1147 = vmatpush1.msra.mxu0 0.0
    %1148 = vmatprep.subr.mxu0 0.0
    %1149 = vmatpush1.msra.mxu0 0.0
    %1150 = vmatprep.subr.mxu0 0.0
    %1151 = vmatpush1.msra.mxu0 0.0
    %1152 = vmatprep.subr.mxu0 0.0
    %1153 = vmatpush1.msra.mxu0 0.0
    %1154 = vmatprep.subr.mxu0 0.0
    %1155 = vmatpush1.msra.mxu0 0.0
    %1156 = vmatprep.subr.mxu0 0.0
    %1157 = vmatpush1.msra.mxu0 0.0
    %1158 = vmatprep.subr.mxu0 0.0
    %1159 = vmatpush1.msra.mxu0 0.0
    %1160 = vmatprep.subr.mxu0 0.0
    %1161 = vmatpush1.msra.mxu0 0.0
    %1162 = vmatprep.subr.mxu0 0.0
    %1163 = vmatpush1.msra.mxu0 0.0
    %1164 = vmatprep.subr.mxu0 0.0
    %1165 = vmatpush1.msra.mxu0 0.0
    %1166 = vmatprep.subr.mxu0 0.0
    %1167 = vmatpush1.msra.mxu0 0.0
    %1168 = vmatprep.subr.mxu0 0.0
    %1169 = vmatpush1.msra.mxu0 0.0
    %1170 = vmatprep.subr.mxu0 0.0
    %1171 = vmatpush1.msra.mxu0 0.0
    %1172 = vmatprep.subr.mxu0 0.0
    %1173 = vmatpush1.msra.mxu0 0.0
    %1174 = vmatprep.subr.mxu0 0.0
    %1175 = vmatpush1.msra.mxu0 0.0
    %1176 = vmatprep.subr.mxu0 0.0
    %1177 = vmatpush1.msra.mxu0 0.0
    %1178 = vmatprep.subr.mxu0 0.0
    %1179 = vmatpush1.msra.mxu0 0.0
    %1180 = vmatprep.mubr.f32.mxu0 0.0
    %1181 = vmatmul.mubr.f32.gmra.mrb[0].mxu0 %v1005
    %v1182 = vpop.f32.mrb[0].mxu0
    %v1183 = vadd.f32 0.0, %v1182
    %v1184 = vpop.f32.mrb[0].mxu0
    %1185 = vdwg.mxu0
    %1186 = vmatprep.subr.mxu0 0.0
    %1187 = vmatpush1.msra.mxu0 %v1112
    %1188 = vmatprep.subr.mxu0 0.0
    %1189 = vmatpush1.msra.mxu0 %v1113
    %1190 = vmatprep.subr.mxu0 0.0
    %1191 = vmatpush1.msra.mxu0 0.0
    %1192 = vmatprep.subr.mxu0 0.0
    %1193 = vmatpush1.msra.mxu0 0.0
    %1194 = vmatprep.subr.mxu0 0.0
    %1195 = vmatpush1.msra.mxu0 0.0
    %1196 = vmatprep.subr.mxu0 0.0
    %1197 = vmatpush1.msra.mxu0 0.0
    %1198 = vmatprep.subr.mxu0 0.0
    %1199 = vmatpush1.msra.mxu0 0.0
    %1200 = vmatprep.subr.mxu0 0.0
    %1201 = vmatpush1.msra.mxu0 0.0
    %1202 = vmatprep.subr.mxu0 0.0
    %1203 = vmatpush1.msra.mxu0 0.0
    %1204 = vmatprep.subr.mxu0 0.0
    %1205 = vmatpush1.msra.mxu0 0.0
    %1206 = vmatprep.subr.mxu0 0.0
    %1207 = vmatpush1.msra.mxu0 0.0
    %1208 = vmatprep.subr.mxu0 0.0
    %1209 = vmatpush1.msra.mxu0 0.0
    %1210 = vmatprep.subr.mxu0 0.0
    %1211 = vmatpush1.msra.mxu0 0.0
    %1212 = vmatprep.subr.mxu0 0.0
    %1213 = vmatpush1.msra.mxu0 0.0
    %1214 = vmatprep.subr.mxu0 0.0
    %1215 = vmatpush1.msra.mxu0 0.0
    %1216 = vmatprep.subr.mxu0 0.0
    %1217 = vmatpush1.msra.mxu0 0.0
    %1218 = vmatprep.subr.mxu0 0.0
    %1219 = vmatpush1.msra.mxu0 0.0
    %1220 = vmatprep.subr.mxu0 0.0
    %1221 = vmatpush1.msra.mxu0 0.0
    %1222 = vmatprep.subr.mxu0 0.0
    %1223 = vmatpush1.msra.mxu0 0.0
    %1224 = vmatprep.subr.mxu0 0.0
    %1225 = vmatpush1.msra.mxu0 0.0
    %1226 = vmatprep.subr.mxu0 0.0
    %1227 = vmatpush1.msra.mxu0 0.0
    %1228 = vmatprep.subr.mxu0 0.0
    %1229 = vmatpush1.msra.mxu0 0.0
    %1230 = vmatprep.subr.mxu0 0.0
    %1231 = vmatpush1.msra.mxu0 0.0
    %1232 = vmatprep.subr.mxu0 0.0
    %1233 = vmatpush1.msra.mxu0 0.0
    %1234 = vmatprep.subr.mxu0 0.0
    %1235 = vmatpush1.msra.mxu0 0.0
    %1236 = vmatprep.subr.mxu0 0.0
    %1237 = vmatpush1.msra.mxu0 0.0
    %1238 = vmatprep.subr.mxu0 0.0
    %1239 = vmatpush1.msra.mxu0 0.0
    %1240 = vmatprep.subr.mxu0 0.0
    %1241 = vmatpush1.msra.mxu0 0.0
    %1242 = vmatprep.subr.mxu0 0.0
    %1243 = vmatpush1.msra.mxu0 0.0
    %1244 = vmatprep.subr.mxu0 0.0
    %1245 = vmatpush1.msra.mxu0 0.0
    %1246 = vmatprep.subr.mxu0 0.0
    %1247 = vmatpush1.msra.mxu0 0.0
    %1248 = vmatprep.subr.mxu0 0.0
    %1249 = vmatpush1.msra.mxu0 0.0
    %1250 = vmatprep.mubr.f32.mxu0 0.0
    %1251 = vmatmul.mubr.f32.gmra.mrb[0].mxu0 %v931
    %v1252 = vpop.f32.mrb[0].mxu0
    %v1253 = vadd.f32 %v1183, %v1252
    %v1254 = vpop.f32.mrb[0].mxu0
    %1255 = vdwg.mxu0
    %1256 = vmatprep.subr.mxu0 0.0
    %1257 = vmatpush1.msra.mxu0 %v1080
    %1258 = vmatprep.subr.mxu0 0.0
    %1259 = vmatpush1.msra.mxu0 %v1081
    %1260 = vmatprep.subr.mxu0 0.0
    %1261 = vmatpush1.msra.mxu0 %v1082
    %1262 = vmatprep.subr.mxu0 0.0
    %1263 = vmatpush1.msra.mxu0 %v1083
    %1264 = vmatprep.subr.mxu0 0.0
    %1265 = vmatpush1.msra.mxu0 %v1084
    %1266 = vmatprep.subr.mxu0 0.0
    %1267 = vmatpush1.msra.mxu0 %v1085
    %1268 = vmatprep.subr.mxu0 0.0
    %1269 = vmatpush1.msra.mxu0 %v1086
    %1270 = vmatprep.subr.mxu0 0.0
    %1271 = vmatpush1.msra.mxu0 %v1087
    %1272 = vmatprep.subr.mxu0 0.0
    %1273 = vmatpush1.msra.mxu0 %v1088
    %1274 = vmatprep.subr.mxu0 0.0
    %1275 = vmatpush1.msra.mxu0 %v1089
    %1276 = vmatprep.subr.mxu0 0.0
    %1277 = vmatpush1.msra.mxu0 %v1090
    %1278 = vmatprep.subr.mxu0 0.0
    %1279 = vmatpush1.msra.mxu0 %v1091
    %1280 = vmatprep.subr.mxu0 0.0
    %1281 = vmatpush1.msra.mxu0 %v1092
    %1282 = vmatprep.subr.mxu0 0.0
    %1283 = vmatpush1.msra.mxu0 %v1093
    %1284 = vmatprep.subr.mxu0 0.0
    %1285 = vmatpush1.msra.mxu0 %v1094
    %1286 = vmatprep.subr.mxu0 0.0
    %1287 = vmatpush1.msra.mxu0 %v1095
    %1288 = vmatprep.subr.mxu0 0.0
    %1289 = vmatpush1.msra.mxu0 %v1096
    %1290 = vmatprep.subr.mxu0 0.0
    %1291 = vmatpush1.msra.mxu0 %v1097
    %1292 = vmatprep.subr.mxu0 0.0
    %1293 = vmatpush1.msra.mxu0 %v1098
    %1294 = vmatprep.subr.mxu0 0.0
    %1295 = vmatpush1.msra.mxu0 %v1099
    %1296 = vmatprep.subr.mxu0 0.0
    %1297 = vmatpush1.msra.mxu0 %v1100
    %1298 = vmatprep.subr.mxu0 0.0
    %1299 = vmatpush1.msra.mxu0 %v1101
    %1300 = vmatprep.subr.mxu0 0.0
    %1301 = vmatpush1.msra.mxu0 %v1102
    %1302 = vmatprep.subr.mxu0 0.0
    %1303 = vmatpush1.msra.mxu0 %v1103
    %1304 = vmatprep.subr.mxu0 0.0
    %1305 = vmatpush1.msra.mxu0 %v1104
    %1306 = vmatprep.subr.mxu0 0.0
    %1307 = vmatpush1.msra.mxu0 %v1105
    %1308 = vmatprep.subr.mxu0 0.0
    %1309 = vmatpush1.msra.mxu0 %v1106
    %1310 = vmatprep.subr.mxu0 0.0
    %1311 = vmatpush1.msra.mxu0 %v1107
    %1312 = vmatprep.subr.mxu0 0.0
    %1313 = vmatpush1.msra.mxu0 %v1108
    %1314 = vmatprep.subr.mxu0 0.0
    %1315 = vmatpush1.msra.mxu0 %v1109
    %1316 = vmatprep.subr.mxu0 0.0
    %1317 = vmatpush1.msra.mxu0 %v1110
    %1318 = vmatprep.subr.mxu0 0.0
    %1319 = vmatpush1.msra.mxu0 %v1111
    %1320 = vmatprep.mubr.f32.mxu0 %v1079
    %1321 = vmatmul.mubr.f32.gmra.mrb[0].mxu0 %v1078
    %v1322 = vpop.f32.mrb[0].mxu0
    %v1323 = vadd.f32 %v1253, %v1322
    %v1324 = vpop.f32.mrb[0].mxu0
    %1325 = vdwg.mxu0
    %v1326 = vld [vmem:[%s7 + $0x148] sm:$0x1]
    %v1327 = vadd.f32 %v1323, %v1326
    %v1328 = vmax.f32 %v1327, 0.0
    %v1329 = vld [vmem:[%s7 + $0x30] sm:$0xff]
    %v1330 = vld [vmem:[%s7 + $0x38] sm:$0xff]
    %v1331 = vld [vmem:[%s7 + $0x150] sm:$0x1]
    %v1333 = vsel %vm663, %v1328, 0
    %1335 = vmatprep.subr.mxu0 0.0
    %1336 = vmatpush1.msra.mxu0 %v1329
    %1337 = vmatprep.subr.mxu0 0.0
    %1338 = vmatpush1.msra.mxu0 %v1330
    %1339 = vmatprep.subr.mxu0 0.0
    %1340 = vmatpush1.msra.mxu0 0.0
    %1341 = vmatprep.subr.mxu0 0.0
    %1342 = vmatpush1.msra.mxu0 0.0
    %1343 = vmatprep.subr.mxu0 0.0
    %1344 = vmatpush1.msra.mxu0 0.0
    %1345 = vmatprep.subr.mxu0 0.0
    %1346 = vmatpush1.msra.mxu0 0.0
    %1347 = vmatprep.subr.mxu0 0.0
    %1348 = vmatpush1.msra.mxu0 0.0
    %1349 = vmatprep.subr.mxu0 0.0
    %1350 = vmatpush1.msra.mxu0 0.0
    %1351 = vmatprep.subr.mxu0 0.0
    %1352 = vmatpush1.msra.mxu0 0.0
    %1353 = vmatprep.subr.mxu0 0.0
    %1354 = vmatpush1.msra.mxu0 0.0
    %1355 = vmatprep.subr.mxu0 0.0
    %1356 = vmatpush1.msra.mxu0 0.0
    %1357 = vmatprep.subr.mxu0 0.0
    %1358 = vmatpush1.msra.mxu0 0.0
    %1359 = vmatprep.subr.mxu0 0.0
    %1360 = vmatpush1.msra.mxu0 0.0
    %1361 = vmatprep.subr.mxu0 0.0
    %1362 = vmatpush1.msra.mxu0 0.0
    %1363 = vmatprep.subr.mxu0 0.0
    %1364 = vmatpush1.msra.mxu0 0.0
    %1365 = vmatprep.subr.mxu0 0.0
    %1366 = vmatpush1.msra.mxu0 0.0
    %1367 = vmatprep.subr.mxu0 0.0
    %1368 = vmatpush1.msra.mxu0 0.0
    %1369 = vmatprep.subr.mxu0 0.0
    %1370 = vmatpush1.msra.mxu0 0.0
    %1371 = vmatprep.subr.mxu0 0.0
    %1372 = vmatpush1.msra.mxu0 0.0
    %1373 = vmatprep.subr.mxu0 0.0
    %1374 = vmatpush1.msra.mxu0 0.0
    %1375 = vmatprep.subr.mxu0 0.0
    %1376 = vmatpush1.msra.mxu0 0.0
    %1377 = vmatprep.subr.mxu0 0.0
    %1378 = vmatpush1.msra.mxu0 0.0
    %1379 = vmatprep.subr.mxu0 0.0
    %1380 = vmatpush1.msra.mxu0 0.0
    %1381 = vmatprep.subr.mxu0 0.0
    %1382 = vmatpush1.msra.mxu0 0.0
    %1383 = vmatprep.subr.mxu0 0.0
    %1384 = vmatpush1.msra.mxu0 0.0
    %1385 = vmatprep.subr.mxu0 0.0
    %1386 = vmatpush1.msra.mxu0 0.0
    %1387 = vmatprep.subr.mxu0 0.0
    %1388 = vmatpush1.msra.mxu0 0.0
    %1389 = vmatprep.subr.mxu0 0.0
    %1390 = vmatpush1.msra.mxu0 0.0
    %1391 = vmatprep.subr.mxu0 0.0
    %1392 = vmatpush1.msra.mxu0 0.0
    %1393 = vmatprep.subr.mxu0 0.0
    %1394 = vmatpush1.msra.mxu0 0.0
    %1395 = vmatprep.subr.mxu0 0.0
    %1396 = vmatpush1.msra.mxu0 0.0
    %1397 = vmatprep.subr.mxu0 0.0
    %1398 = vmatpush1.msra.mxu0 0.0
    %1399 = vmatprep.mubr.f32.mxu0 0.0
    %1400 = vmatmul.mubr.f32.gmra.mrb[0].mxu0 %v1333
    %v1401 = vpop.f32.mrb[0].mxu0
    %v1402 = vadd.f32 %v1331, %v1401
    %v1403 = vpop.f32.mrb[0].mxu0
    %1404 = vdwg.mxu0
    %v1405 = vmax.f32 %v1402, 0.0
    %v1406 = vld [vmem:[%s7 + $0x158] sm:$0x1]
    %v1407 = vmul.f32 %v1405, %v1406
    %vm1408 = vcmask 122880
    %v1409 = vsel %vm1408, %v1407, 0.0
    %1410 = vadd.xlane.f32.xlu0 %v1409
    %v1411 = vpop.xlane.xlu0 %1410
    %v1412 = vld [vmem:[%s7 + $0x160] sm:$0x1]
    %v1413 = vadd.f32 %v1411, %v1412
    %v1414 = vsub.f32 0.0, %v1413
    %v1415 = vmul.f32 %v1414, 1.442695
    %v1416 = vpow.pop %v1415
    %v1417 = vadd.f32 %v1416, 1.0
    %v1418 = vrcp.pop %v1417
    %vm1419 = vcmask 0
    %1420 = vst.msk [vmem:[#allocation5] sm:$0x1] %vm1419, %v1418
    // Predicated region
    $region38: #{forward.1} parent=1 // pred_check
      _
    $region39: #{forward.1} parent=1 // pred_check_branch
      %1422 = sbr.rel (0) target = $region41
    $region40: #{forward.1} parent=1 // pred_region
      %s1424 = ssub.s32 16, 16
      %1425 = vsyncadd [#allocation3], %s1424
      %s1427 = sshll.u32 [#allocation5], 4
      %s1428 = int_to_ptr.vmem [resolvable:$true] %s1427
      %1430 = dma.vmem_to_hbm [thread:$0]  %s1428, 16, %s8, [#allocation3]
    $region41: #{forward.1} parent=1 // pred_fallthru
      _
    // Predicated region
    $region42: #{forward.1} parent=1 // pred_check
      _
    $region43: #{forward.1} parent=1 // pred_check_branch
      %1432 = sbr.rel (0) target = $region45
    $region44: #{forward.1} parent=1 // pred_region
      %1433 = dma.done [#allocation3], 16
    $region45: #{forward.1} parent=1 // pred_fallthru
      _
    %1434 = vsyncpa [#allocation3], 1
    %1435 = vsyncpa [#allocation4], 1

</llo_original>
